<compile_context>
chip_gen: v6e
topology: v6e:2x2x1
jax: 0.10.0
libtpu: 0.0.40
codegen_flags: <defaults>
</compile_context>

<pallas_src>
import jax
import jax.numpy as jnp
from jax.experimental import pallas as pl
from jax.experimental.pallas import tpu as pltpu

_EPS = 1e-5

# Offsets into the packed parameter vector (37 f32 scalars, lives in SMEM).
_W1, _B1, _G1, _BE1 = 0, 8, 12, 16     # l1 weight (4x2), l1 bias, bn1 gamma, bn1 beta
_W2, _B2, _G2, _BE2 = 20, 28, 30, 32   # l2 weight (2x4), l2 bias, bn2 gamma, bn2 beta
_W3, _B3 = 34, 36                      # l3 weight (1x2), l3 bias
_NPARAMS = 37

# VMEM scratch row layout:
#   acc_ref (16,128): 0-3  sum(h1-c1) per lane, 4-7  sum((h1-c1)^2),
#                     8-9  sum(h2-c2) per lane, 10-11 sum((h2-c2)^2)
#   ss_ref  (16,128): 0-3 scale1, 4-7 shift1, 8-9 scale2, 10-11 shift2,
#                     12-13 c2 (pad-column value of h2)


def _network_kernel(x_ref, p_ref, b_ref, o_ref, acc_ref, ss_ref):
    phase = pl.program_id(0)
    tile = pl.program_id(1)
    n_tiles = pl.num_programs(1)

    bf = b_ref[0].astype(jnp.float32)          # true (unpadded) batch size

    def swish(v):                              # x * relu(x)
        return v * jnp.maximum(v, 0.0)

    def l2_pre(n, f):                          # layer-2 pre-activation, feature f
        return (p_ref[_W2 + 4 * f + 0] * n[0] + p_ref[_W2 + 4 * f + 1] * n[1]
                + p_ref[_W2 + 4 * f + 2] * n[2] + p_ref[_W2 + 4 * f + 3] * n[3]
                + p_ref[_B2 + f])

    def bn_scale_shift(s_row, q_row, c, g, be):
        # acc rows hold shifted sums over the padded batch; padded columns
        # contribute exactly 0, so  mu = c + S/B,  var = Q/B - (S/B)^2
        # (biased variance, training-mode BatchNorm).
        sd = jnp.sum(acc_ref[s_row:s_row + 1, :], axis=1, keepdims=True) / bf
        qd = jnp.sum(acc_ref[q_row:q_row + 1, :], axis=1, keepdims=True) / bf
        mu = c + sd
        var = qd - sd * sd
        scale = g * jax.lax.rsqrt(var + _EPS)
        shift = be - mu * scale
        return scale, shift

    def bn1_consts():
        # Per-feature BN1 scale/shift and the layer-2 pad-column value c2
        # (what h2 evaluates to on a zero-padded input column).
        scale1, shift1, n1_pad = [], [], []
        for f in range(4):
            c1 = swish(p_ref[_B1 + f])                     # pad-column value of h1_f
            sc, sh = bn_scale_shift(f, 4 + f, c1, p_ref[_G1 + f], p_ref[_BE1 + f])
            scale1.append(sc)
            shift1.append(sh)
            n1_pad.append(c1 * sc + sh)
        c2 = [swish(l2_pre(n1_pad, f)) for f in range(2)]
        return scale1, shift1, c2

    # ---- layer 1 (2 -> 4) + swish: unrolled scalar-broadcast VPU FMAs ------
    x0 = x_ref[0]                              # (TILE_R, 128)
    x1 = x_ref[1]
    h1 = [swish(p_ref[_W1 + 2 * f] * x0 + p_ref[_W1 + 2 * f + 1] * x1
                + p_ref[_B1 + f]) for f in range(4)]

    # ------------------------ phase 0: BN1 statistics -----------------------
    @pl.when(phase == 0)
    def _():
        @pl.when(tile == 0)
        def _():
            acc_ref[...] = jnp.zeros_like(acc_ref)

        for f in range(4):
            d = h1[f] - swish(p_ref[_B1 + f])              # exactly 0 on padded cols
            acc_ref[f:f + 1, :] += jnp.sum(d, axis=0, keepdims=True)
            acc_ref[4 + f:5 + f, :] += jnp.sum(d * d, axis=0, keepdims=True)

        @pl.when(tile == n_tiles - 1)
        def _():
            scale1, shift1, c2 = bn1_consts()
            for f in range(4):
                ss_ref[f:f + 1, :] = jnp.broadcast_to(scale1[f], (1, 128))
                ss_ref[4 + f:5 + f, :] = jnp.broadcast_to(shift1[f], (1, 128))
            for f in range(2):
                ss_ref[12 + f:13 + f, :] = jnp.broadcast_to(c2[f], (1, 128))

    # -------------- phases 1 & 2: need normalized layer-1 / layer-2 ---------
    @pl.when(phase >= 1)
    def _():
        # Fused BN affine: one mul + one add per element per feature.
        n1 = [h1[f] * ss_ref[f:f + 1, :] + ss_ref[4 + f:5 + f, :] for f in range(4)]
        h2 = [swish(l2_pre(n1, f)) for f in range(2)]

        # -------- phase 1: BN2 statistics --------
        @pl.when(phase == 1)
        def _():
            for f in range(2):
                d = h2[f] - ss_ref[12 + f:13 + f, :]       # exactly 0 on padded cols
                acc_ref[8 + f:9 + f, :] += jnp.sum(d, axis=0, keepdims=True)
                acc_ref[10 + f:11 + f, :] += jnp.sum(d * d, axis=0, keepdims=True)

            @pl.when(tile == n_tiles - 1)
            def _():
                _, _, c2 = bn1_consts()
                for f in range(2):
                    sc, sh = bn_scale_shift(8 + f, 10 + f, c2[f],
                                            p_ref[_G2 + f], p_ref[_BE2 + f])
                    ss_ref[8 + f:9 + f, :] = jnp.broadcast_to(sc, (1, 128))
                    ss_ref[10 + f:11 + f, :] = jnp.broadcast_to(sh, (1, 128))

        # -------- phase 2: final output (lane+sublane dense (R,128) store) --------
        @pl.when(phase == 2)
        def _():
            n2 = [h2[f] * ss_ref[8 + f:9 + f, :] + ss_ref[10 + f:11 + f, :]
                  for f in range(2)]
            y = p_ref[_W3 + 0] * n2[0] + p_ref[_W3 + 1] * n2[1] + p_ref[_B3]
            o_ref[...] = jnp.maximum(y, 0.0).astype(o_ref.dtype)


def _pack_params(p):
    """Pack all Linear/BN parameters (PyTorch shapes) into one flat f32 vector."""
    flat = jnp.concatenate([
        p["l1_w"].reshape(-1), p["l1_b"],        # 8 + 4
        p["bn1_g"], p["bn1_b"],                  # 4 + 4
        p["l2_w"].reshape(-1), p["l2_b"],        # 8 + 2
        p["bn2_g"], p["bn2_b"],                  # 2 + 2
        p["l3_w"].reshape(-1), p["l3_b"],        # 2 + 1
    ]).astype(jnp.float32)
    assert flat.shape == (_NPARAMS,)
    return flat


_MAX_TILE_R = 256   # 256 rows x 128 lanes = 32768 samples / tile (~256 KiB x-tile)


def network_forward(x, params, *, max_tile_r=_MAX_TILE_R):
    """x: (B, 2) float32.  params: dict of weights in PyTorch shape conventions."""
    B = x.shape[0]
    r_needed = max(1, -(-B // 128))              # rows of 128 lanes
    r8 = -(-r_needed // 8) * 8                   # round up to full-sublane groups
    tile_r = min(max_tile_r, r8)                 # rows per grid tile (multiple of 8)
    r_total = -(-r8 // tile_r) * tile_r
    num_tiles = r_total // tile_r
    bp = r_total * 128

    # (B, 2) -> (2, R, 128): batch on (sublane, lane), zeros in the padded slots.
    # TODO(synk): accept a feature-major (2, R, 128) input (and produce the padded
    # (R, 128) output) upstream to avoid this extra transpose+pad HBM pass.
    xt = jnp.zeros((2, bp), jnp.float32).at[:, :B].set(x.astype(jnp.float32).T)
    xt = xt.reshape(2, r_total, 128)
    flat = _pack_params(params)                  # (37,)  -> SMEM
    b_arr = jnp.array([B], jnp.int32)            # runtime batch size -> SMEM

    out = pl.pallas_call(
        _network_kernel,
        out_shape=jax.ShapeDtypeStruct((r_total, 128), jnp.float32),
        grid=(3, num_tiles),                     # (phase, batch tile)
        in_specs=[
            pl.BlockSpec((2, tile_r, 128), lambda ph, t: (0, t, 0)),      # x
            pl.BlockSpec(memory_space=pltpu.MemorySpace.SMEM),            # params
            pl.BlockSpec(memory_space=pltpu.MemorySpace.SMEM),            # batch size
        ],
        out_specs=pl.BlockSpec((tile_r, 128), lambda ph, t: (t, 0)),
        scratch_shapes=[
            pltpu.VMEM((16, 128), jnp.float32),  # acc: per-lane shifted sum / sumsq
            pltpu.VMEM((16, 128), jnp.float32),  # ss:  BN scale/shift + layer-2 pad const
        ],
        # Phases and the shared statistics accumulators make both axes sequential.
        # TODO(synk): on v7x, split the tile axis across the two TensorCores
        # (core_parallel) and combine per-core partial sums before the normalize phases.
        compiler_params=pltpu.CompilerParams(
            dimension_semantics=("arbitrary", "arbitrary")),
    )(xt, flat, b_arr)

    return out.reshape(bp)[:B].reshape(B, 1)


def init_params(key):
    """Deterministic parameter init matching the shapes of the PyTorch module."""
    ks = jax.random.split(key, 3)

    def linear_init(k, out_f, in_f):
        # PyTorch default: U(-1/sqrt(in), 1/sqrt(in)) for weight and bias.
        kw, kb = jax.random.split(k)
        bound = 1.0 / jnp.sqrt(in_f)
        w = jax.random.uniform(kw, (out_f, in_f), jnp.float32, -bound, bound)
        b = jax.random.uniform(kb, (out_f,), jnp.float32, -bound, bound)
        return w, b

    l1_w, l1_b = linear_init(ks[0], 4, 2)
    l2_w, l2_b = linear_init(ks[1], 2, 4)
    l3_w, l3_b = linear_init(ks[2], 1, 2)

    return {
        "l1_w": l1_w, "l1_b": l1_b,
        "bn1_g": jnp.ones((4,), jnp.float32), "bn1_b": jnp.zeros((4,), jnp.float32),
        "l2_w": l2_w, "l2_b": l2_b,
        "bn2_g": jnp.ones((2,), jnp.float32), "bn2_b": jnp.zeros((2,), jnp.float32),
        "l3_w": l3_w, "l3_b": l3_b,
    }


def reference_forward(x, p):
    """Pure-JAX reference replicating the PyTorch forward (training-mode BN)."""
    def swish(v):
        return v * jnp.maximum(v, 0.0)

    def bn(v, g, b):
        mu = jnp.mean(v, axis=0, keepdims=True)
        var = jnp.mean((v - mu) ** 2, axis=0, keepdims=True)
        return (v - mu) / jnp.sqrt(var + _EPS) * g + b

    h = swish(x @ p["l1_w"].T + p["l1_b"])
    h = bn(h, p["bn1_g"], p["bn1_b"])
    h = swish(h @ p["l2_w"].T + p["l2_b"])
    h = bn(h, p["bn2_g"], p["bn2_b"])
    return jnp.maximum(h @ p["l3_w"].T + p["l3_b"], 0.0)


if __name__ == "__main__":
    key = jax.random.PRNGKey(0)
    k_p, k1, k2, k3 = jax.random.split(key, 4)
    params = init_params(k_p)

    cases = (
        (8, {}),                        # heavily padded single tile
        (200, {}),                      # batch not a multiple of 128
        (2000, {"max_tile_r": 8}),      # multi-tile path: 2 tiles of (8, 128)
    )
    keys = (k1, k2, k3)
    for (B, kw), kx in zip(cases, keys):
        x = jax.random.normal(kx, (B, 2), jnp.float32)
        out = network_forward(x, params, **kw)
        jax.block_until_ready(out)
        ref = reference_forward(x, params)
        assert out.shape == (B, 1), out.shape
        err = float(jnp.max(jnp.abs(out - ref)))
        assert jnp.allclose(out, ref, atol=1e-4, rtol=1e-4), (B, err)

    print("KERNEL_OK")
</pallas_src>

<mosaic_0001>
module attributes {stable_mosaic.version = 11 : i64} {
  func.func @_network_kernel(%arg0: i32, %arg1: i32, %arg2: memref<2x8x128xf32, #tpu.memory_space<vmem>>, %arg3: memref<37xf32, #tpu.memory_space<smem>>, %arg4: memref<1xi32, #tpu.memory_space<smem>>, %arg5: memref<8x128xf32, #tpu.memory_space<vmem>>, %arg6: memref<16x128xf32, #tpu.memory_space<vmem>>, %arg7: memref<16x128xf32, #tpu.memory_space<vmem>>) attributes {dimension_semantics = [#tpu.dimension_semantics<arbitrary>, #tpu.dimension_semantics<arbitrary>], iteration_bounds = array<i64: 3, 1>, scalar_prefetch = 0 : i64, scratch_operands = 2 : i64, tpu.core_type = #tpu.core_type<tc>, window_params = [{transform_indices = @transform_0, window_bounds = array<i64: 2, 8, 128>}, {transform_indices = @transform_1, window_bounds = array<i64: 37>}, {transform_indices = @transform_2, window_bounds = array<i64: 1>}, {transform_indices = @transform_3, window_bounds = array<i64: 8, 128>}]} {
    %c0 = arith.constant 0 : index
    %0 = memref.load %arg4[%c0] : memref<1xi32, #tpu.memory_space<smem>>
    %1 = arith.sitofp %0 : i32 to f32
    %c0_0 = arith.constant 0 : index
    %c0_1 = arith.constant 0 : index
    %c0_2 = arith.constant 0 : index
    %2 = vector.load %arg2[%c0_0, %c0_1, %c0_2] : memref<2x8x128xf32, #tpu.memory_space<vmem>>, vector<1x8x128xf32>
    %3 = vector.shape_cast %2 : vector<1x8x128xf32> to vector<8x128xf32>
    %c1 = arith.constant 1 : index
    %c0_3 = arith.constant 0 : index
    %c0_4 = arith.constant 0 : index
    %4 = vector.load %arg2[%c1, %c0_3, %c0_4] : memref<2x8x128xf32, #tpu.memory_space<vmem>>, vector<1x8x128xf32>
    %5 = vector.shape_cast %4 : vector<1x8x128xf32> to vector<8x128xf32>
    %c0_5 = arith.constant 0 : index
    %6 = memref.load %arg3[%c0_5] : memref<37xf32, #tpu.memory_space<smem>>
    %7 = vector.broadcast %6 : f32 to vector<8x128xf32>
    %8 = arith.mulf %7, %3 : vector<8x128xf32>
    %c1_6 = arith.constant 1 : index
    %9 = memref.load %arg3[%c1_6] : memref<37xf32, #tpu.memory_space<smem>>
    %10 = vector.broadcast %9 : f32 to vector<8x128xf32>
    %11 = arith.mulf %10, %5 : vector<8x128xf32>
    %12 = arith.addf %8, %11 : vector<8x128xf32>
    %c8 = arith.constant 8 : index
    %13 = memref.load %arg3[%c8] : memref<37xf32, #tpu.memory_space<smem>>
    %14 = vector.broadcast %13 : f32 to vector<8x128xf32>
    %15 = arith.addf %12, %14 : vector<8x128xf32>
    %cst = arith.constant 0.000000e+00 : f32
    %16 = vector.broadcast %cst : f32 to vector<8x128xf32>
    %17 = arith.maximumf %15, %16 : vector<8x128xf32>
    %18 = arith.mulf %15, %17 : vector<8x128xf32>
    %c2 = arith.constant 2 : index
    %19 = memref.load %arg3[%c2] : memref<37xf32, #tpu.memory_space<smem>>
    %20 = vector.broadcast %19 : f32 to vector<8x128xf32>
    %21 = arith.mulf %20, %3 : vector<8x128xf32>
    %c3 = arith.constant 3 : index
    %22 = memref.load %arg3[%c3] : memref<37xf32, #tpu.memory_space<smem>>
    %23 = vector.broadcast %22 : f32 to vector<8x128xf32>
    %24 = arith.mulf %23, %5 : vector<8x128xf32>
    %25 = arith.addf %21, %24 : vector<8x128xf32>
    %c9 = arith.constant 9 : index
    %26 = memref.load %arg3[%c9] : memref<37xf32, #tpu.memory_space<smem>>
    %27 = vector.broadcast %26 : f32 to vector<8x128xf32>
    %28 = arith.addf %25, %27 : vector<8x128xf32>
    %cst_7 = arith.constant 0.000000e+00 : f32
    %29 = vector.broadcast %cst_7 : f32 to vector<8x128xf32>
    %30 = arith.maximumf %28, %29 : vector<8x128xf32>
    %31 = arith.mulf %28, %30 : vector<8x128xf32>
    %c4 = arith.constant 4 : index
    %32 = memref.load %arg3[%c4] : memref<37xf32, #tpu.memory_space<smem>>
    %33 = vector.broadcast %32 : f32 to vector<8x128xf32>
    %34 = arith.mulf %33, %3 : vector<8x128xf32>
    %c5 = arith.constant 5 : index
    %35 = memref.load %arg3[%c5] : memref<37xf32, #tpu.memory_space<smem>>
    %36 = vector.broadcast %35 : f32 to vector<8x128xf32>
    %37 = arith.mulf %36, %5 : vector<8x128xf32>
    %38 = arith.addf %34, %37 : vector<8x128xf32>
    %c10 = arith.constant 10 : index
    %39 = memref.load %arg3[%c10] : memref<37xf32, #tpu.memory_space<smem>>
    %40 = vector.broadcast %39 : f32 to vector<8x128xf32>
    %41 = arith.addf %38, %40 : vector<8x128xf32>
    %cst_8 = arith.constant 0.000000e+00 : f32
    %42 = vector.broadcast %cst_8 : f32 to vector<8x128xf32>
    %43 = arith.maximumf %41, %42 : vector<8x128xf32>
    %44 = arith.mulf %41, %43 : vector<8x128xf32>
    %c6 = arith.constant 6 : index
    %45 = memref.load %arg3[%c6] : memref<37xf32, #tpu.memory_space<smem>>
    %46 = vector.broadcast %45 : f32 to vector<8x128xf32>
    %47 = arith.mulf %46, %3 : vector<8x128xf32>
    %c7 = arith.constant 7 : index
    %48 = memref.load %arg3[%c7] : memref<37xf32, #tpu.memory_space<smem>>
    %49 = vector.broadcast %48 : f32 to vector<8x128xf32>
    %50 = arith.mulf %49, %5 : vector<8x128xf32>
    %51 = arith.addf %47, %50 : vector<8x128xf32>
    %c11 = arith.constant 11 : index
    %52 = memref.load %arg3[%c11] : memref<37xf32, #tpu.memory_space<smem>>
    %53 = vector.broadcast %52 : f32 to vector<8x128xf32>
    %54 = arith.addf %51, %53 : vector<8x128xf32>
    %cst_9 = arith.constant 0.000000e+00 : f32
    %55 = vector.broadcast %cst_9 : f32 to vector<8x128xf32>
    %56 = arith.maximumf %54, %55 : vector<8x128xf32>
    %57 = arith.mulf %54, %56 : vector<8x128xf32>
    %c0_i32 = arith.constant 0 : i32
    %58 = arith.cmpi eq, %arg0, %c0_i32 : i32
    %59 = arith.extui %58 : i1 to i32
    %c0_i32_10 = arith.constant 0 : i32
    %60 = arith.cmpi ne, %59, %c0_i32_10 : i32
    scf.if %60 {
      %c0_i32_12 = arith.constant 0 : i32
      %64 = arith.cmpi eq, %arg1, %c0_i32_12 : i32
      %65 = arith.extui %64 : i1 to i32
      %c0_i32_13 = arith.constant 0 : i32
      %66 = arith.cmpi ne, %65, %c0_i32_13 : i32
      scf.if %66 {
        %cst_64 = arith.constant 0.000000e+00 : f32
        %134 = vector.broadcast %cst_64 : f32 to vector<16x128xf32>
        %c0_65 = arith.constant 0 : index
        %c0_66 = arith.constant 0 : index
        %135 = vector.load %arg6[%c0_65, %c0_66] : memref<16x128xf32, #tpu.memory_space<vmem>>, vector<16x128xf32>
        tpu.vector_store %arg6[%c0_65, %c0_66], %134 {strides = array<i32>} : memref<16x128xf32, #tpu.memory_space<vmem>>, vector<16x128xf32>,
      } else {
      }
      %c8_14 = arith.constant 8 : index
      %67 = memref.load %arg3[%c8_14] : memref<37xf32, #tpu.memory_space<smem>>
      %cst_15 = arith.constant 0.000000e+00 : f32
      %68 = arith.maximumf %67, %cst_15 : f32
      %69 = arith.mulf %67, %68 : f32
      %70 = vector.broadcast %69 : f32 to vector<8x128xf32>
      %71 = arith.subf %18, %70 : vector<8x128xf32>
      %c0_16 = arith.constant 0 : index
      %c0_17 = arith.constant 0 : index
      %72 = vector.load %arg6[%c0_16, %c0_17] : memref<16x128xf32, #tpu.memory_space<vmem>>, vector<1x128xf32>
      %cst_18 = arith.constant dense<0.000000e+00> : vector<128xf32>
      %73 = vector.multi_reduction <add>, %71, %cst_18 [0] : vector<8x128xf32> to vector<128xf32>
      %74 = vector.shape_cast %73 : vector<128xf32> to vector<1x128xf32>
      %75 = arith.addf %72, %74 : vector<1x128xf32>
      %c0_19 = arith.constant 0 : index
      %c0_20 = arith.constant 0 : index
      %76 = vector.load %arg6[%c0_19, %c0_20] : memref<16x128xf32, #tpu.memory_space<vmem>>, vector<1x128xf32>
      tpu.vector_store %arg6[%c0_19, %c0_20], %75 {strides = array<i32>} : memref<16x128xf32, #tpu.memory_space<vmem>>, vector<1x128xf32>,
      %c4_21 = arith.constant 4 : index
      %c0_22 = arith.constant 0 : index
      %77 = vector.load %arg6[%c4_21, %c0_22] : memref<16x128xf32, #tpu.memory_space<vmem>>, vector<1x128xf32>
      %78 = arith.mulf %71, %71 : vector<8x128xf32>
      %cst_23 = arith.constant dense<0.000000e+00> : vector<128xf32>
      %79 = vector.multi_reduction <add>, %78, %cst_23 [0] : vector<8x128xf32> to vector<128xf32>
      %80 = vector.shape_cast %79 : vector<128xf32> to vector<1x128xf32>
      %81 = arith.addf %77, %80 : vector<1x128xf32>
      %c4_24 = arith.constant 4 : index
      %c0_25 = arith.constant 0 : index
      %82 = vector.load %arg6[%c4_24, %c0_25] : memref<16x128xf32, #tpu.memory_space<vmem>>, vector<1x128xf32>
      tpu.vector_store %arg6[%c4_24, %c0_25], %81 {strides = array<i32>} : memref<16x128xf32, #tpu.memory_space<vmem>>, vector<1x128xf32>,
      %c9_26 = arith.constant 9 : index
      %83 = memref.load %arg3[%c9_26] : memref<37xf32, #tpu.memory_space<smem>>
      %cst_27 = arith.constant 0.000000e+00 : f32
      %84 = arith.maximumf %83, %cst_27 : f32
      %85 = arith.mulf %83, %84 : f32
      %86 = vector.broadcast %85 : f32 to vector<8x128xf32>
      %87 = arith.subf %31, %86 : vector<8x128xf32>
      %c1_28 = arith.constant 1 : index
      %c0_29 = arith.constant 0 : index
      %88 = vector.load %arg6[%c1_28, %c0_29] : memref<16x128xf32, #tpu.memory_space<vmem>>, vector<1x128xf32>
      %cst_30 = arith.constant dense<0.000000e+00> : vector<128xf32>
      %89 = vector.multi_reduction <add>, %87, %cst_30 [0] : vector<8x128xf32> to vector<128xf32>
      %90 = vector.shape_cast %89 : vector<128xf32> to vector<1x128xf32>
      %91 = arith.addf %88, %90 : vector<1x128xf32>
      %c1_31 = arith.constant 1 : index
      %c0_32 = arith.constant 0 : index
      %92 = vector.load %arg6[%c1_31, %c0_32] : memref<16x128xf32, #tpu.memory_space<vmem>>, vector<1x128xf32>
      tpu.vector_store %arg6[%c1_31, %c0_32], %91 {strides = array<i32>} : memref<16x128xf32, #tpu.memory_space<vmem>>, vector<1x128xf32>,
      %c5_33 = arith.constant 5 : index
      %c0_34 = arith.constant 0 : index
      %93 = vector.load %arg6[%c5_33, %c0_34] : memref<16x128xf32, #tpu.memory_space<vmem>>, vector<1x128xf32>
      %94 = arith.mulf %87, %87 : vector<8x128xf32>
      %cst_35 = arith.constant dense<0.000000e+00> : vector<128xf32>
      %95 = vector.multi_reduction <add>, %94, %cst_35 [0] : vector<8x128xf32> to vector<128xf32>
      %96 = vector.shape_cast %95 : vector<128xf32> to vector<1x128xf32>
      %97 = arith.addf %93, %96 : vector<1x128xf32>
      %c5_36 = arith.constant 5 : index
      %c0_37 = arith.constant 0 : index
      %98 = vector.load %arg6[%c5_36, %c0_37] : memref<16x128xf32, #tpu.memory_space<vmem>>, vector<1x128xf32>
      tpu.vector_store %arg6[%c5_36, %c0_37], %97 {strides = array<i32>} : memref<16x128xf32, #tpu.memory_space<vmem>>, vector<1x128xf32>,
      %c10_38 = arith.constant 10 : index
      %99 = memref.load %arg3[%c10_38] : memref<37xf32, #tpu.memory_space<smem>>
      %cst_39 = arith.constant 0.000000e+00 : f32
      %100 = arith.maximumf %99, %cst_39 : f32
      %101 = arith.mulf %99, %100 : f32
      %102 = vector.broadcast %101 : f32 to vector<8x128xf32>
      %103 = arith.subf %44, %102 : vector<8x128xf32>
      %c2_40 = arith.constant 2 : index
      %c0_41 = arith.constant 0 : index
      %104 = vector.load %arg6[%c2_40, %c0_41] : memref<16x128xf32, #tpu.memory_space<vmem>>, vector<1x128xf32>
      %cst_42 = arith.constant dense<0.000000e+00> : vector<128xf32>
      %105 = vector.multi_reduction <add>, %103, %cst_42 [0] : vector<8x128xf32> to vector<128xf32>
      %106 = vector.shape_cast %105 : vector<128xf32> to vector<1x128xf32>
      %107 = arith.addf %104, %106 : vector<1x128xf32>
      %c2_43 = arith.constant 2 : index
      %c0_44 = arith.constant 0 : index
      %108 = vector.load %arg6[%c2_43, %c0_44] : memref<16x128xf32, #tpu.memory_space<vmem>>, vector<1x128xf32>
      tpu.vector_store %arg6[%c2_43, %c0_44], %107 {strides = array<i32>} : memref<16x128xf32, #tpu.memory_space<vmem>>, vector<1x128xf32>,
      %c6_45 = arith.constant 6 : index
      %c0_46 = arith.constant 0 : index
      %109 = vector.load %arg6[%c6_45, %c0_46] : memref<16x128xf32, #tpu.memory_space<vmem>>, vector<1x128xf32>
      %110 = arith.mulf %103, %103 : vector<8x128xf32>
      %cst_47 = arith.constant dense<0.000000e+00> : vector<128xf32>
      %111 = vector.multi_reduction <add>, %110, %cst_47 [0] : vector<8x128xf32> to vector<128xf32>
      %112 = vector.shape_cast %111 : vector<128xf32> to vector<1x128xf32>
      %113 = arith.addf %109, %112 : vector<1x128xf32>
      %c6_48 = arith.constant 6 : index
      %c0_49 = arith.constant 0 : index
      %114 = vector.load %arg6[%c6_48, %c0_49] : memref<16x128xf32, #tpu.memory_space<vmem>>, vector<1x128xf32>
      tpu.vector_store %arg6[%c6_48, %c0_49], %113 {strides = array<i32>} : memref<16x128xf32, #tpu.memory_space<vmem>>, vector<1x128xf32>,
      %c11_50 = arith.constant 11 : index
      %115 = memref.load %arg3[%c11_50] : memref<37xf32, #tpu.memory_space<smem>>
      %cst_51 = arith.constant 0.000000e+00 : f32
      %116 = arith.maximumf %115, %cst_51 : f32
      %117 = arith.mulf %115, %116 : f32
      %118 = vector.broadcast %117 : f32 to vector<8x128xf32>
      %119 = arith.subf %57, %118 : vector<8x128xf32>
      %c3_52 = arith.constant 3 : index
      %c0_53 = arith.constant 0 : index
      %120 = vector.load %arg6[%c3_52, %c0_53] : memref<16x128xf32, #tpu.memory_space<vmem>>, vector<1x128xf32>
      %cst_54 = arith.constant dense<0.000000e+00> : vector<128xf32>
      %121 = vector.multi_reduction <add>, %119, %cst_54 [0] : vector<8x128xf32> to vector<128xf32>
      %122 = vector.shape_cast %121 : vector<128xf32> to vector<1x128xf32>
      %123 = arith.addf %120, %122 : vector<1x128xf32>
      %c3_55 = arith.constant 3 : index
      %c0_56 = arith.constant 0 : index
      %124 = vector.load %arg6[%c3_55, %c0_56] : memref<16x128xf32, #tpu.memory_space<vmem>>, vector<1x128xf32>
      tpu.vector_store %arg6[%c3_55, %c0_56], %123 {strides = array<i32>} : memref<16x128xf32, #tpu.memory_space<vmem>>, vector<1x128xf32>,
      %c7_57 = arith.constant 7 : index
      %c0_58 = arith.constant 0 : index
      %125 = vector.load %arg6[%c7_57, %c0_58] : memref<16x128xf32, #tpu.memory_space<vmem>>, vector<1x128xf32>
      %126 = arith.mulf %119, %119 : vector<8x128xf32>
      %cst_59 = arith.constant dense<0.000000e+00> : vector<128xf32>
      %127 = vector.multi_reduction <add>, %126, %cst_59 [0] : vector<8x128xf32> to vector<128xf32>
      %128 = vector.shape_cast %127 : vector<128xf32> to vector<1x128xf32>
      %129 = arith.addf %125, %128 : vector<1x128xf32>
      %c7_60 = arith.constant 7 : index
      %c0_61 = arith.constant 0 : index
      %130 = vector.load %arg6[%c7_60, %c0_61] : memref<16x128xf32, #tpu.memory_space<vmem>>, vector<1x128xf32>
      tpu.vector_store %arg6[%c7_60, %c0_61], %129 {strides = array<i32>} : memref<16x128xf32, #tpu.memory_space<vmem>>, vector<1x128xf32>,
      %c0_i32_62 = arith.constant 0 : i32
      %131 = arith.cmpi eq, %arg1, %c0_i32_62 : i32
      %132 = arith.extui %131 : i1 to i32
      %c0_i32_63 = arith.constant 0 : i32
      %133 = arith.cmpi ne, %132, %c0_i32_63 : i32
      scf.if %133 {
        %c8_64 = arith.constant 8 : index
        %134 = memref.load %arg3[%c8_64] : memref<37xf32, #tpu.memory_space<smem>>
        %cst_65 = arith.constant 0.000000e+00 : f32
        %135 = arith.maximumf %134, %cst_65 : f32
        %136 = arith.mulf %134, %135 : f32
        %c12 = arith.constant 12 : index
        %137 = memref.load %arg3[%c12] : memref<37xf32, #tpu.memory_space<smem>>
        %c16 = arith.constant 16 : index
        %138 = memref.load %arg3[%c16] : memref<37xf32, #tpu.memory_space<smem>>
        %c0_66 = arith.constant 0 : index
        %c0_67 = arith.constant 0 : index
        %139 = vector.load %arg6[%c0_66, %c0_67] : memref<16x128xf32, #tpu.memory_space<vmem>>, vector<1x128xf32>
        %cst_68 = arith.constant dense<0.000000e+00> : vector<1xf32>
        %140 = vector.multi_reduction <add>, %139, %cst_68 [1] : vector<1x128xf32> to vector<1xf32>
        %141 = vector.shape_cast %140 : vector<1xf32> to vector<1x1xf32>
        %142 = vector.broadcast %1 : f32 to vector<1x1xf32>
        %143 = arith.divf %141, %142 : vector<1x1xf32>
        %c4_69 = arith.constant 4 : index
        %c0_70 = arith.constant 0 : index
        %144 = vector.load %arg6[%c4_69, %c0_70] : memref<16x128xf32, #tpu.memory_space<vmem>>, vector<1x128xf32>
        %cst_71 = arith.constant dense<0.000000e+00> : vector<1xf32>
        %145 = vector.multi_reduction <add>, %144, %cst_71 [1] : vector<1x128xf32> to vector<1xf32>
        %146 = vector.shape_cast %145 : vector<1xf32> to vector<1x1xf32>
        %147 = vector.broadcast %1 : f32 to vector<1x1xf32>
        %148 = arith.divf %146, %147 : vector<1x1xf32>
        %149 = vector.broadcast %136 : f32 to vector<1x1xf32>
        %150 = arith.addf %149, %143 : vector<1x1xf32>
        %151 = arith.mulf %143, %143 : vector<1x1xf32>
        %152 = arith.subf %148, %151 : vector<1x1xf32>
        %cst_72 = arith.constant 9.99999974E-6 : f32
        %153 = vector.broadcast %cst_72 : f32 to vector<1x1xf32>
        %154 = arith.addf %152, %153 : vector<1x1xf32>
        %155 = math.rsqrt %154 : vector<1x1xf32>
        %156 = vector.broadcast %137 : f32 to vector<1x1xf32>
        %157 = arith.mulf %156, %155 : vector<1x1xf32>
        %158 = arith.mulf %150, %157 : vector<1x1xf32>
        %159 = vector.broadcast %138 : f32 to vector<1x1xf32>
        %160 = arith.subf %159, %158 : vector<1x1xf32>
        %161 = vector.broadcast %136 : f32 to vector<1x1xf32>
        %162 = arith.mulf %161, %157 : vector<1x1xf32>
        %163 = arith.addf %162, %160 : vector<1x1xf32>
        %c9_73 = arith.constant 9 : index
        %164 = memref.load %arg3[%c9_73] : memref<37xf32, #tpu.memory_space<smem>>
        %cst_74 = arith.constant 0.000000e+00 : f32
        %165 = arith.maximumf %164, %cst_74 : f32
        %166 = arith.mulf %164, %165 : f32
        %c13 = arith.constant 13 : index
        %167 = memref.load %arg3[%c13] : memref<37xf32, #tpu.memory_space<smem>>
        %c17 = arith.constant 17 : index
        %168 = memref.load %arg3[%c17] : memref<37xf32, #tpu.memory_space<smem>>
        %c1_75 = arith.constant 1 : index
        %c0_76 = arith.constant 0 : index
        %169 = vector.load %arg6[%c1_75, %c0_76] : memref<16x128xf32, #tpu.memory_space<vmem>>, vector<1x128xf32>
        %cst_77 = arith.constant dense<0.000000e+00> : vector<1xf32>
        %170 = vector.multi_reduction <add>, %169, %cst_77 [1] : vector<1x128xf32> to vector<1xf32>
        %171 = vector.shape_cast %170 : vector<1xf32> to vector<1x1xf32>
        %172 = vector.broadcast %1 : f32 to vector<1x1xf32>
        %173 = arith.divf %171, %172 : vector<1x1xf32>
        %c5_78 = arith.constant 5 : index
        %c0_79 = arith.constant 0 : index
        %174 = vector.load %arg6[%c5_78, %c0_79] : memref<16x128xf32, #tpu.memory_space<vmem>>, vector<1x128xf32>
        %cst_80 = arith.constant dense<0.000000e+00> : vector<1xf32>
        %175 = vector.multi_reduction <add>, %174, %cst_80 [1] : vector<1x128xf32> to vector<1xf32>
        %176 = vector.shape_cast %175 : vector<1xf32> to vector<1x1xf32>
        %177 = vector.broadcast %1 : f32 to vector<1x1xf32>
        %178 = arith.divf %176, %177 : vector<1x1xf32>
        %179 = vector.broadcast %166 : f32 to vector<1x1xf32>
        %180 = arith.addf %179, %173 : vector<1x1xf32>
        %181 = arith.mulf %173, %173 : vector<1x1xf32>
        %182 = arith.subf %178, %181 : vector<1x1xf32>
        %cst_81 = arith.constant 9.99999974E-6 : f32
        %183 = vector.broadcast %cst_81 : f32 to vector<1x1xf32>
        %184 = arith.addf %182, %183 : vector<1x1xf32>
        %185 = math.rsqrt %184 : vector<1x1xf32>
        %186 = vector.broadcast %167 : f32 to vector<1x1xf32>
        %187 = arith.mulf %186, %185 : vector<1x1xf32>
        %188 = arith.mulf %180, %187 : vector<1x1xf32>
        %189 = vector.broadcast %168 : f32 to vector<1x1xf32>
        %190 = arith.subf %189, %188 : vector<1x1xf32>
        %191 = vector.broadcast %166 : f32 to vector<1x1xf32>
        %192 = arith.mulf %191, %187 : vector<1x1xf32>
        %193 = arith.addf %192, %190 : vector<1x1xf32>
        %c10_82 = arith.constant 10 : index
        %194 = memref.load %arg3[%c10_82] : memref<37xf32, #tpu.memory_space<smem>>
        %cst_83 = arith.constant 0.000000e+00 : f32
        %195 = arith.maximumf %194, %cst_83 : f32
        %196 = arith.mulf %194, %195 : f32
        %c14 = arith.constant 14 : index
        %197 = memref.load %arg3[%c14] : memref<37xf32, #tpu.memory_space<smem>>
        %c18 = arith.constant 18 : index
        %198 = memref.load %arg3[%c18] : memref<37xf32, #tpu.memory_space<smem>>
        %c2_84 = arith.constant 2 : index
        %c0_85 = arith.constant 0 : index
        %199 = vector.load %arg6[%c2_84, %c0_85] : memref<16x128xf32, #tpu.memory_space<vmem>>, vector<1x128xf32>
        %cst_86 = arith.constant dense<0.000000e+00> : vector<1xf32>
        %200 = vector.multi_reduction <add>, %199, %cst_86 [1] : vector<1x128xf32> to vector<1xf32>
        %201 = vector.shape_cast %200 : vector<1xf32> to vector<1x1xf32>
        %202 = vector.broadcast %1 : f32 to vector<1x1xf32>
        %203 = arith.divf %201, %202 : vector<1x1xf32>
        %c6_87 = arith.constant 6 : index
        %c0_88 = arith.constant 0 : index
        %204 = vector.load %arg6[%c6_87, %c0_88] : memref<16x128xf32, #tpu.memory_space<vmem>>, vector<1x128xf32>
        %cst_89 = arith.constant dense<0.000000e+00> : vector<1xf32>
        %205 = vector.multi_reduction <add>, %204, %cst_89 [1] : vector<1x128xf32> to vector<1xf32>
        %206 = vector.shape_cast %205 : vector<1xf32> to vector<1x1xf32>
        %207 = vector.broadcast %1 : f32 to vector<1x1xf32>
        %208 = arith.divf %206, %207 : vector<1x1xf32>
        %209 = vector.broadcast %196 : f32 to vector<1x1xf32>
        %210 = arith.addf %209, %203 : vector<1x1xf32>
        %211 = arith.mulf %203, %203 : vector<1x1xf32>
        %212 = arith.subf %208, %211 : vector<1x1xf32>
        %cst_90 = arith.constant 9.99999974E-6 : f32
        %213 = vector.broadcast %cst_90 : f32 to vector<1x1xf32>
        %214 = arith.addf %212, %213 : vector<1x1xf32>
        %215 = math.rsqrt %214 : vector<1x1xf32>
        %216 = vector.broadcast %197 : f32 to vector<1x1xf32>
        %217 = arith.mulf %216, %215 : vector<1x1xf32>
        %218 = arith.mulf %210, %217 : vector<1x1xf32>
        %219 = vector.broadcast %198 : f32 to vector<1x1xf32>
        %220 = arith.subf %219, %218 : vector<1x1xf32>
        %221 = vector.broadcast %196 : f32 to vector<1x1xf32>
        %222 = arith.mulf %221, %217 : vector<1x1xf32>
        %223 = arith.addf %222, %220 : vector<1x1xf32>
        %c11_91 = arith.constant 11 : index
        %224 = memref.load %arg3[%c11_91] : memref<37xf32, #tpu.memory_space<smem>>
        %cst_92 = arith.constant 0.000000e+00 : f32
        %225 = arith.maximumf %224, %cst_92 : f32
        %226 = arith.mulf %224, %225 : f32
        %c15 = arith.constant 15 : index
        %227 = memref.load %arg3[%c15] : memref<37xf32, #tpu.memory_space<smem>>
        %c19 = arith.constant 19 : index
        %228 = memref.load %arg3[%c19] : memref<37xf32, #tpu.memory_space<smem>>
        %c3_93 = arith.constant 3 : index
        %c0_94 = arith.constant 0 : index
        %229 = vector.load %arg6[%c3_93, %c0_94] : memref<16x128xf32, #tpu.memory_space<vmem>>, vector<1x128xf32>
        %cst_95 = arith.constant dense<0.000000e+00> : vector<1xf32>
        %230 = vector.multi_reduction <add>, %229, %cst_95 [1] : vector<1x128xf32> to vector<1xf32>
        %231 = vector.shape_cast %230 : vector<1xf32> to vector<1x1xf32>
        %232 = vector.broadcast %1 : f32 to vector<1x1xf32>
        %233 = arith.divf %231, %232 : vector<1x1xf32>
        %c7_96 = arith.constant 7 : index
        %c0_97 = arith.constant 0 : index
        %234 = vector.load %arg6[%c7_96, %c0_97] : memref<16x128xf32, #tpu.memory_space<vmem>>, vector<1x128xf32>
        %cst_98 = arith.constant dense<0.000000e+00> : vector<1xf32>
        %235 = vector.multi_reduction <add>, %234, %cst_98 [1] : vector<1x128xf32> to vector<1xf32>
        %236 = vector.shape_cast %235 : vector<1xf32> to vector<1x1xf32>
        %237 = vector.broadcast %1 : f32 to vector<1x1xf32>
        %238 = arith.divf %236, %237 : vector<1x1xf32>
        %239 = vector.broadcast %226 : f32 to vector<1x1xf32>
        %240 = arith.addf %239, %233 : vector<1x1xf32>
        %241 = arith.mulf %233, %233 : vector<1x1xf32>
        %242 = arith.subf %238, %241 : vector<1x1xf32>
        %cst_99 = arith.constant 9.99999974E-6 : f32
        %243 = vector.broadcast %cst_99 : f32 to vector<1x1xf32>
        %244 = arith.addf %242, %243 : vector<1x1xf32>
        %245 = math.rsqrt %244 : vector<1x1xf32>
        %246 = vector.broadcast %227 : f32 to vector<1x1xf32>
        %247 = arith.mulf %246, %245 : vector<1x1xf32>
        %248 = arith.mulf %240, %247 : vector<1x1xf32>
        %249 = vector.broadcast %228 : f32 to vector<1x1xf32>
        %250 = arith.subf %249, %248 : vector<1x1xf32>
        %251 = vector.broadcast %226 : f32 to vector<1x1xf32>
        %252 = arith.mulf %251, %247 : vector<1x1xf32>
        %253 = arith.addf %252, %250 : vector<1x1xf32>
        %c20 = arith.constant 20 : index
        %254 = memref.load %arg3[%c20] : memref<37xf32, #tpu.memory_space<smem>>
        %255 = vector.broadcast %254 : f32 to vector<1x1xf32>
        %256 = arith.mulf %255, %163 : vector<1x1xf32>
        %c21 = arith.constant 21 : index
        %257 = memref.load %arg3[%c21] : memref<37xf32, #tpu.memory_space<smem>>
        %258 = vector.broadcast %257 : f32 to vector<1x1xf32>
        %259 = arith.mulf %258, %193 : vector<1x1xf32>
        %260 = arith.addf %256, %259 : vector<1x1xf32>
        %c22 = arith.constant 22 : index
        %261 = memref.load %arg3[%c22] : memref<37xf32, #tpu.memory_space<smem>>
        %262 = vector.broadcast %261 : f32 to vector<1x1xf32>
        %263 = arith.mulf %262, %223 : vector<1x1xf32>
        %264 = arith.addf %260, %263 : vector<1x1xf32>
        %c23 = arith.constant 23 : index
        %265 = memref.load %arg3[%c23] : memref<37xf32, #tpu.memory_space<smem>>
        %266 = vector.broadcast %265 : f32 to vector<1x1xf32>
        %267 = arith.mulf %266, %253 : vector<1x1xf32>
        %268 = arith.addf %264, %267 : vector<1x1xf32>
        %c28 = arith.constant 28 : index
        %269 = memref.load %arg3[%c28] : memref<37xf32, #tpu.memory_space<smem>>
        %270 = vector.broadcast %269 : f32 to vector<1x1xf32>
        %271 = arith.addf %268, %270 : vector<1x1xf32>
        %cst_100 = arith.constant 0.000000e+00 : f32
        %272 = vector.broadcast %cst_100 : f32 to vector<1x1xf32>
        %273 = arith.maximumf %271, %272 : vector<1x1xf32>
        %274 = arith.mulf %271, %273 : vector<1x1xf32>
        %c24 = arith.constant 24 : index
        %275 = memref.load %arg3[%c24] : memref<37xf32, #tpu.memory_space<smem>>
        %276 = vector.broadcast %275 : f32 to vector<1x1xf32>
        %277 = arith.mulf %276, %163 : vector<1x1xf32>
        %c25 = arith.constant 25 : index
        %278 = memref.load %arg3[%c25] : memref<37xf32, #tpu.memory_space<smem>>
        %279 = vector.broadcast %278 : f32 to vector<1x1xf32>
        %280 = arith.mulf %279, %193 : vector<1x1xf32>
        %281 = arith.addf %277, %280 : vector<1x1xf32>
        %c26 = arith.constant 26 : index
        %282 = memref.load %arg3[%c26] : memref<37xf32, #tpu.memory_space<smem>>
        %283 = vector.broadcast %282 : f32 to vector<1x1xf32>
        %284 = arith.mulf %283, %223 : vector<1x1xf32>
        %285 = arith.addf %281, %284 : vector<1x1xf32>
        %c27 = arith.constant 27 : index
        %286 = memref.load %arg3[%c27] : memref<37xf32, #tpu.memory_space<smem>>
        %287 = vector.broadcast %286 : f32 to vector<1x1xf32>
        %288 = arith.mulf %287, %253 : vector<1x1xf32>
        %289 = arith.addf %285, %288 : vector<1x1xf32>
        %c29 = arith.constant 29 : index
        %290 = memref.load %arg3[%c29] : memref<37xf32, #tpu.memory_space<smem>>
        %291 = vector.broadcast %290 : f32 to vector<1x1xf32>
        %292 = arith.addf %289, %291 : vector<1x1xf32>
        %cst_101 = arith.constant 0.000000e+00 : f32
        %293 = vector.broadcast %cst_101 : f32 to vector<1x1xf32>
        %294 = arith.maximumf %292, %293 : vector<1x1xf32>
        %295 = arith.mulf %292, %294 : vector<1x1xf32>
        %296 = vector.shape_cast %157 : vector<1x1xf32> to vector<1x1xf32>
        %297 = vector.broadcast %296 : vector<1x1xf32> to vector<1x128xf32>
        %c0_102 = arith.constant 0 : index
        %c0_103 = arith.constant 0 : index
        %298 = vector.load %arg7[%c0_102, %c0_103] : memref<16x128xf32, #tpu.memory_space<vmem>>, vector<1x128xf32>
        tpu.vector_store %arg7[%c0_102, %c0_103], %297 {strides = array<i32>} : memref<16x128xf32, #tpu.memory_space<vmem>>, vector<1x128xf32>,
        %299 = vector.shape_cast %160 : vector<1x1xf32> to vector<1x1xf32>
        %300 = vector.broadcast %299 : vector<1x1xf32> to vector<1x128xf32>
        %c4_104 = arith.constant 4 : index
        %c0_105 = arith.constant 0 : index
        %301 = vector.load %arg7[%c4_104, %c0_105] : memref<16x128xf32, #tpu.memory_space<vmem>>, vector<1x128xf32>
        tpu.vector_store %arg7[%c4_104, %c0_105], %300 {strides = array<i32>} : memref<16x128xf32, #tpu.memory_space<vmem>>, vector<1x128xf32>,
        %302 = vector.shape_cast %187 : vector<1x1xf32> to vector<1x1xf32>
        %303 = vector.broadcast %302 : vector<1x1xf32> to vector<1x128xf32>
        %c1_106 = arith.constant 1 : index
        %c0_107 = arith.constant 0 : index
        %304 = vector.load %arg7[%c1_106, %c0_107] : memref<16x128xf32, #tpu.memory_space<vmem>>, vector<1x128xf32>
        tpu.vector_store %arg7[%c1_106, %c0_107], %303 {strides = array<i32>} : memref<16x128xf32, #tpu.memory_space<vmem>>, vector<1x128xf32>,
        %305 = vector.shape_cast %190 : vector<1x1xf32> to vector<1x1xf32>
        %306 = vector.broadcast %305 : vector<1x1xf32> to vector<1x128xf32>
        %c5_108 = arith.constant 5 : index
        %c0_109 = arith.constant 0 : index
        %307 = vector.load %arg7[%c5_108, %c0_109] : memref<16x128xf32, #tpu.memory_space<vmem>>, vector<1x128xf32>
        tpu.vector_store %arg7[%c5_108, %c0_109], %306 {strides = array<i32>} : memref<16x128xf32, #tpu.memory_space<vmem>>, vector<1x128xf32>,
        %308 = vector.shape_cast %217 : vector<1x1xf32> to vector<1x1xf32>
        %309 = vector.broadcast %308 : vector<1x1xf32> to vector<1x128xf32>
        %c2_110 = arith.constant 2 : index
        %c0_111 = arith.constant 0 : index
        %310 = vector.load %arg7[%c2_110, %c0_111] : memref<16x128xf32, #tpu.memory_space<vmem>>, vector<1x128xf32>
        tpu.vector_store %arg7[%c2_110, %c0_111], %309 {strides = array<i32>} : memref<16x128xf32, #tpu.memory_space<vmem>>, vector<1x128xf32>,
        %311 = vector.shape_cast %220 : vector<1x1xf32> to vector<1x1xf32>
        %312 = vector.broadcast %311 : vector<1x1xf32> to vector<1x128xf32>
        %c6_112 = arith.constant 6 : index
        %c0_113 = arith.constant 0 : index
        %313 = vector.load %arg7[%c6_112, %c0_113] : memref<16x128xf32, #tpu.memory_space<vmem>>, vector<1x128xf32>
        tpu.vector_store %arg7[%c6_112, %c0_113], %312 {strides = array<i32>} : memref<16x128xf32, #tpu.memory_space<vmem>>, vector<1x128xf32>,
        %314 = vector.shape_cast %247 : vector<1x1xf32> to vector<1x1xf32>
        %315 = vector.broadcast %314 : vector<1x1xf32> to vector<1x128xf32>
        %c3_114 = arith.constant 3 : index
        %c0_115 = arith.constant 0 : index
        %316 = vector.load %arg7[%c3_114, %c0_115] : memref<16x128xf32, #tpu.memory_space<vmem>>, vector<1x128xf32>
        tpu.vector_store %arg7[%c3_114, %c0_115], %315 {strides = array<i32>} : memref<16x128xf32, #tpu.memory_space<vmem>>, vector<1x128xf32>,
        %317 = vector.shape_cast %250 : vector<1x1xf32> to vector<1x1xf32>
        %318 = vector.broadcast %317 : vector<1x1xf32> to vector<1x128xf32>
        %c7_116 = arith.constant 7 : index
        %c0_117 = arith.constant 0 : index
        %319 = vector.load %arg7[%c7_116, %c0_117] : memref<16x128xf32, #tpu.memory_space<vmem>>, vector<1x128xf32>
        tpu.vector_store %arg7[%c7_116, %c0_117], %318 {strides = array<i32>} : memref<16x128xf32, #tpu.memory_space<vmem>>, vector<1x128xf32>,
        %320 = vector.shape_cast %274 : vector<1x1xf32> to vector<1x1xf32>
        %321 = vector.broadcast %320 : vector<1x1xf32> to vector<1x128xf32>
        %c12_118 = arith.constant 12 : index
        %c0_119 = arith.constant 0 : index
        %322 = vector.load %arg7[%c12_118, %c0_119] : memref<16x128xf32, #tpu.memory_space<vmem>>, vector<1x128xf32>
        tpu.vector_store %arg7[%c12_118, %c0_119], %321 {strides = array<i32>} : memref<16x128xf32, #tpu.memory_space<vmem>>, vector<1x128xf32>,
        %323 = vector.shape_cast %295 : vector<1x1xf32> to vector<1x1xf32>
        %324 = vector.broadcast %323 : vector<1x1xf32> to vector<1x128xf32>
        %c13_120 = arith.constant 13 : index
        %c0_121 = arith.constant 0 : index
        %325 = vector.load %arg7[%c13_120, %c0_121] : memref<16x128xf32, #tpu.memory_space<vmem>>, vector<1x128xf32>
        tpu.vector_store %arg7[%c13_120, %c0_121], %324 {strides = array<i32>} : memref<16x128xf32, #tpu.memory_space<vmem>>, vector<1x128xf32>,
      } else {
      }
    } else {
    }
    %c1_i32 = arith.constant 1 : i32
    %61 = arith.cmpi sge, %arg0, %c1_i32 : i32
    %62 = arith.extui %61 : i1 to i32
    %c0_i32_11 = arith.constant 0 : i32
    %63 = arith.cmpi ne, %62, %c0_i32_11 : i32
    scf.if %63 {
      %c0_12 = arith.constant 0 : index
      %c0_13 = arith.constant 0 : index
      %64 = vector.load %arg7[%c0_12, %c0_13] : memref<16x128xf32, #tpu.memory_space<vmem>>, vector<1x128xf32>
      %65 = vector.broadcast %64 : vector<1x128xf32> to vector<8x128xf32>
      %66 = arith.mulf %18, %65 : vector<8x128xf32>
      %c4_14 = arith.constant 4 : index
      %c0_15 = arith.constant 0 : index
      %67 = vector.load %arg7[%c4_14, %c0_15] : memref<16x128xf32, #tpu.memory_space<vmem>>, vector<1x128xf32>
      %68 = vector.broadcast %67 : vector<1x128xf32> to vector<8x128xf32>
      %69 = arith.addf %66, %68 : vector<8x128xf32>
      %c1_16 = arith.constant 1 : index
      %c0_17 = arith.constant 0 : index
      %70 = vector.load %arg7[%c1_16, %c0_17] : memref<16x128xf32, #tpu.memory_space<vmem>>, vector<1x128xf32>
      %71 = vector.broadcast %70 : vector<1x128xf32> to vector<8x128xf32>
      %72 = arith.mulf %31, %71 : vector<8x128xf32>
      %c5_18 = arith.constant 5 : index
      %c0_19 = arith.constant 0 : index
      %73 = vector.load %arg7[%c5_18, %c0_19] : memref<16x128xf32, #tpu.memory_space<vmem>>, vector<1x128xf32>
      %74 = vector.broadcast %73 : vector<1x128xf32> to vector<8x128xf32>
      %75 = arith.addf %72, %74 : vector<8x128xf32>
      %c2_20 = arith.constant 2 : index
      %c0_21 = arith.constant 0 : index
      %76 = vector.load %arg7[%c2_20, %c0_21] : memref<16x128xf32, #tpu.memory_space<vmem>>, vector<1x128xf32>
      %77 = vector.broadcast %76 : vector<1x128xf32> to vector<8x128xf32>
      %78 = arith.mulf %44, %77 : vector<8x128xf32>
      %c6_22 = arith.constant 6 : index
      %c0_23 = arith.constant 0 : index
      %79 = vector.load %arg7[%c6_22, %c0_23] : memref<16x128xf32, #tpu.memory_space<vmem>>, vector<1x128xf32>
      %80 = vector.broadcast %79 : vector<1x128xf32> to vector<8x128xf32>
      %81 = arith.addf %78, %80 : vector<8x128xf32>
      %c3_24 = arith.constant 3 : index
      %c0_25 = arith.constant 0 : index
      %82 = vector.load %arg7[%c3_24, %c0_25] : memref<16x128xf32, #tpu.memory_space<vmem>>, vector<1x128xf32>
      %83 = vector.broadcast %82 : vector<1x128xf32> to vector<8x128xf32>
      %84 = arith.mulf %57, %83 : vector<8x128xf32>
      %c7_26 = arith.constant 7 : index
      %c0_27 = arith.constant 0 : index
      %85 = vector.load %arg7[%c7_26, %c0_27] : memref<16x128xf32, #tpu.memory_space<vmem>>, vector<1x128xf32>
      %86 = vector.broadcast %85 : vector<1x128xf32> to vector<8x128xf32>
      %87 = arith.addf %84, %86 : vector<8x128xf32>
      %c20 = arith.constant 20 : index
      %88 = memref.load %arg3[%c20] : memref<37xf32, #tpu.memory_space<smem>>
      %89 = vector.broadcast %88 : f32 to vector<8x128xf32>
      %90 = arith.mulf %89, %69 : vector<8x128xf32>
      %c21 = arith.constant 21 : index
      %91 = memref.load %arg3[%c21] : memref<37xf32, #tpu.memory_space<smem>>
      %92 = vector.broadcast %91 : f32 to vector<8x128xf32>
      %93 = arith.mulf %92, %75 : vector<8x128xf32>
      %94 = arith.addf %90, %93 : vector<8x128xf32>
      %c22 = arith.constant 22 : index
      %95 = memref.load %arg3[%c22] : memref<37xf32, #tpu.memory_space<smem>>
      %96 = vector.broadcast %95 : f32 to vector<8x128xf32>
      %97 = arith.mulf %96, %81 : vector<8x128xf32>
      %98 = arith.addf %94, %97 : vector<8x128xf32>
      %c23 = arith.constant 23 : index
      %99 = memref.load %arg3[%c23] : memref<37xf32, #tpu.memory_space<smem>>
      %100 = vector.broadcast %99 : f32 to vector<8x128xf32>
      %101 = arith.mulf %100, %87 : vector<8x128xf32>
      %102 = arith.addf %98, %101 : vector<8x128xf32>
      %c28 = arith.constant 28 : index
      %103 = memref.load %arg3[%c28] : memref<37xf32, #tpu.memory_space<smem>>
      %104 = vector.broadcast %103 : f32 to vector<8x128xf32>
      %105 = arith.addf %102, %104 : vector<8x128xf32>
      %cst_28 = arith.constant 0.000000e+00 : f32
      %106 = vector.broadcast %cst_28 : f32 to vector<8x128xf32>
      %107 = arith.maximumf %105, %106 : vector<8x128xf32>
      %108 = arith.mulf %105, %107 : vector<8x128xf32>
      %c24 = arith.constant 24 : index
      %109 = memref.load %arg3[%c24] : memref<37xf32, #tpu.memory_space<smem>>
      %110 = vector.broadcast %109 : f32 to vector<8x128xf32>
      %111 = arith.mulf %110, %69 : vector<8x128xf32>
      %c25 = arith.constant 25 : index
      %112 = memref.load %arg3[%c25] : memref<37xf32, #tpu.memory_space<smem>>
      %113 = vector.broadcast %112 : f32 to vector<8x128xf32>
      %114 = arith.mulf %113, %75 : vector<8x128xf32>
      %115 = arith.addf %111, %114 : vector<8x128xf32>
      %c26 = arith.constant 26 : index
      %116 = memref.load %arg3[%c26] : memref<37xf32, #tpu.memory_space<smem>>
      %117 = vector.broadcast %116 : f32 to vector<8x128xf32>
      %118 = arith.mulf %117, %81 : vector<8x128xf32>
      %119 = arith.addf %115, %118 : vector<8x128xf32>
      %c27 = arith.constant 27 : index
      %120 = memref.load %arg3[%c27] : memref<37xf32, #tpu.memory_space<smem>>
      %121 = vector.broadcast %120 : f32 to vector<8x128xf32>
      %122 = arith.mulf %121, %87 : vector<8x128xf32>
      %123 = arith.addf %119, %122 : vector<8x128xf32>
      %c29 = arith.constant 29 : index
      %124 = memref.load %arg3[%c29] : memref<37xf32, #tpu.memory_space<smem>>
      %125 = vector.broadcast %124 : f32 to vector<8x128xf32>
      %126 = arith.addf %123, %125 : vector<8x128xf32>
      %cst_29 = arith.constant 0.000000e+00 : f32
      %127 = vector.broadcast %cst_29 : f32 to vector<8x128xf32>
      %128 = arith.maximumf %126, %127 : vector<8x128xf32>
      %129 = arith.mulf %126, %128 : vector<8x128xf32>
      %c1_i32_30 = arith.constant 1 : i32
      %130 = arith.cmpi eq, %arg0, %c1_i32_30 : i32
      %131 = arith.extui %130 : i1 to i32
      %c0_i32_31 = arith.constant 0 : i32
      %132 = arith.cmpi ne, %131, %c0_i32_31 : i32
      scf.if %132 {
        %c12 = arith.constant 12 : index
        %c0_33 = arith.constant 0 : index
        %136 = vector.load %arg7[%c12, %c0_33] : memref<16x128xf32, #tpu.memory_space<vmem>>, vector<1x128xf32>
        %137 = vector.broadcast %136 : vector<1x128xf32> to vector<8x128xf32>
        %138 = arith.subf %108, %137 : vector<8x128xf32>
        %c8_34 = arith.constant 8 : index
        %c0_35 = arith.constant 0 : index
        %139 = vector.load %arg6[%c8_34, %c0_35] : memref<16x128xf32, #tpu.memory_space<vmem>>, vector<1x128xf32>
        %cst_36 = arith.constant dense<0.000000e+00> : vector<128xf32>
        %140 = vector.multi_reduction <add>, %138, %cst_36 [0] : vector<8x128xf32> to vector<128xf32>
        %141 = vector.shape_cast %140 : vector<128xf32> to vector<1x128xf32>
        %142 = arith.addf %139, %141 : vector<1x128xf32>
        %c8_37 = arith.constant 8 : index
        %c0_38 = arith.constant 0 : index
        %143 = vector.load %arg6[%c8_37, %c0_38] : memref<16x128xf32, #tpu.memory_space<vmem>>, vector<1x128xf32>
        tpu.vector_store %arg6[%c8_37, %c0_38], %142 {strides = array<i32>} : memref<16x128xf32, #tpu.memory_space<vmem>>, vector<1x128xf32>,
        %c10_39 = arith.constant 10 : index
        %c0_40 = arith.constant 0 : index
        %144 = vector.load %arg6[%c10_39, %c0_40] : memref<16x128xf32, #tpu.memory_space<vmem>>, vector<1x128xf32>
        %145 = arith.mulf %138, %138 : vector<8x128xf32>
        %cst_41 = arith.constant dense<0.000000e+00> : vector<128xf32>
        %146 = vector.multi_reduction <add>, %145, %cst_41 [0] : vector<8x128xf32> to vector<128xf32>
        %147 = vector.shape_cast %146 : vector<128xf32> to vector<1x128xf32>
        %148 = arith.addf %144, %147 : vector<1x128xf32>
        %c10_42 = arith.constant 10 : index
        %c0_43 = arith.constant 0 : index
        %149 = vector.load %arg6[%c10_42, %c0_43] : memref<16x128xf32, #tpu.memory_space<vmem>>, vector<1x128xf32>
        tpu.vector_store %arg6[%c10_42, %c0_43], %148 {strides = array<i32>} : memref<16x128xf32, #tpu.memory_space<vmem>>, vector<1x128xf32>,
        %c13 = arith.constant 13 : index
        %c0_44 = arith.constant 0 : index
        %150 = vector.load %arg7[%c13, %c0_44] : memref<16x128xf32, #tpu.memory_space<vmem>>, vector<1x128xf32>
        %151 = vector.broadcast %150 : vector<1x128xf32> to vector<8x128xf32>
        %152 = arith.subf %129, %151 : vector<8x128xf32>
        %c9_45 = arith.constant 9 : index
        %c0_46 = arith.constant 0 : index
        %153 = vector.load %arg6[%c9_45, %c0_46] : memref<16x128xf32, #tpu.memory_space<vmem>>, vector<1x128xf32>
        %cst_47 = arith.constant dense<0.000000e+00> : vector<128xf32>
        %154 = vector.multi_reduction <add>, %152, %cst_47 [0] : vector<8x128xf32> to vector<128xf32>
        %155 = vector.shape_cast %154 : vector<128xf32> to vector<1x128xf32>
        %156 = arith.addf %153, %155 : vector<1x128xf32>
        %c9_48 = arith.constant 9 : index
        %c0_49 = arith.constant 0 : index
        %157 = vector.load %arg6[%c9_48, %c0_49] : memref<16x128xf32, #tpu.memory_space<vmem>>, vector<1x128xf32>
        tpu.vector_store %arg6[%c9_48, %c0_49], %156 {strides = array<i32>} : memref<16x128xf32, #tpu.memory_space<vmem>>, vector<1x128xf32>,
        %c11_50 = arith.constant 11 : index
        %c0_51 = arith.constant 0 : index
        %158 = vector.load %arg6[%c11_50, %c0_51] : memref<16x128xf32, #tpu.memory_space<vmem>>, vector<1x128xf32>
        %159 = arith.mulf %152, %152 : vector<8x128xf32>
        %cst_52 = arith.constant dense<0.000000e+00> : vector<128xf32>
        %160 = vector.multi_reduction <add>, %159, %cst_52 [0] : vector<8x128xf32> to vector<128xf32>
        %161 = vector.shape_cast %160 : vector<128xf32> to vector<1x128xf32>
        %162 = arith.addf %158, %161 : vector<1x128xf32>
        %c11_53 = arith.constant 11 : index
        %c0_54 = arith.constant 0 : index
        %163 = vector.load %arg6[%c11_53, %c0_54] : memref<16x128xf32, #tpu.memory_space<vmem>>, vector<1x128xf32>
        tpu.vector_store %arg6[%c11_53, %c0_54], %162 {strides = array<i32>} : memref<16x128xf32, #tpu.memory_space<vmem>>, vector<1x128xf32>,
        %c0_i32_55 = arith.constant 0 : i32
        %164 = arith.cmpi eq, %arg1, %c0_i32_55 : i32
        %165 = arith.extui %164 : i1 to i32
        %c0_i32_56 = arith.constant 0 : i32
        %166 = arith.cmpi ne, %165, %c0_i32_56 : i32
        scf.if %166 {
          %c8_57 = arith.constant 8 : index
          %167 = memref.load %arg3[%c8_57] : memref<37xf32, #tpu.memory_space<smem>>
          %cst_58 = arith.constant 0.000000e+00 : f32
          %168 = arith.maximumf %167, %cst_58 : f32
          %169 = arith.mulf %167, %168 : f32
          %c12_59 = arith.constant 12 : index
          %170 = memref.load %arg3[%c12_59] : memref<37xf32, #tpu.memory_space<smem>>
          %c16 = arith.constant 16 : index
          %171 = memref.load %arg3[%c16] : memref<37xf32, #tpu.memory_space<smem>>
          %c0_60 = arith.constant 0 : index
          %c0_61 = arith.constant 0 : index
          %172 = vector.load %arg6[%c0_60, %c0_61] : memref<16x128xf32, #tpu.memory_space<vmem>>, vector<1x128xf32>
          %cst_62 = arith.constant dense<0.000000e+00> : vector<1xf32>
          %173 = vector.multi_reduction <add>, %172, %cst_62 [1] : vector<1x128xf32> to vector<1xf32>
          %174 = vector.shape_cast %173 : vector<1xf32> to vector<1x1xf32>
          %175 = vector.broadcast %1 : f32 to vector<1x1xf32>
          %176 = arith.divf %174, %175 : vector<1x1xf32>
          %c4_63 = arith.constant 4 : index
          %c0_64 = arith.constant 0 : index
          %177 = vector.load %arg6[%c4_63, %c0_64] : memref<16x128xf32, #tpu.memory_space<vmem>>, vector<1x128xf32>
          %cst_65 = arith.constant dense<0.000000e+00> : vector<1xf32>
          %178 = vector.multi_reduction <add>, %177, %cst_65 [1] : vector<1x128xf32> to vector<1xf32>
          %179 = vector.shape_cast %178 : vector<1xf32> to vector<1x1xf32>
          %180 = vector.broadcast %1 : f32 to vector<1x1xf32>
          %181 = arith.divf %179, %180 : vector<1x1xf32>
          %182 = vector.broadcast %169 : f32 to vector<1x1xf32>
          %183 = arith.addf %182, %176 : vector<1x1xf32>
          %184 = arith.mulf %176, %176 : vector<1x1xf32>
          %185 = arith.subf %181, %184 : vector<1x1xf32>
          %cst_66 = arith.constant 9.99999974E-6 : f32
          %186 = vector.broadcast %cst_66 : f32 to vector<1x1xf32>
          %187 = arith.addf %185, %186 : vector<1x1xf32>
          %188 = math.rsqrt %187 : vector<1x1xf32>
          %189 = vector.broadcast %170 : f32 to vector<1x1xf32>
          %190 = arith.mulf %189, %188 : vector<1x1xf32>
          %191 = arith.mulf %183, %190 : vector<1x1xf32>
          %192 = vector.broadcast %171 : f32 to vector<1x1xf32>
          %193 = arith.subf %192, %191 : vector<1x1xf32>
          %194 = vector.broadcast %169 : f32 to vector<1x1xf32>
          %195 = arith.mulf %194, %190 : vector<1x1xf32>
          %196 = arith.addf %195, %193 : vector<1x1xf32>
          %c9_67 = arith.constant 9 : index
          %197 = memref.load %arg3[%c9_67] : memref<37xf32, #tpu.memory_space<smem>>
          %cst_68 = arith.constant 0.000000e+00 : f32
          %198 = arith.maximumf %197, %cst_68 : f32
          %199 = arith.mulf %197, %198 : f32
          %c13_69 = arith.constant 13 : index
          %200 = memref.load %arg3[%c13_69] : memref<37xf32, #tpu.memory_space<smem>>
          %c17 = arith.constant 17 : index
          %201 = memref.load %arg3[%c17] : memref<37xf32, #tpu.memory_space<smem>>
          %c1_70 = arith.constant 1 : index
          %c0_71 = arith.constant 0 : index
          %202 = vector.load %arg6[%c1_70, %c0_71] : memref<16x128xf32, #tpu.memory_space<vmem>>, vector<1x128xf32>
          %cst_72 = arith.constant dense<0.000000e+00> : vector<1xf32>
          %203 = vector.multi_reduction <add>, %202, %cst_72 [1] : vector<1x128xf32> to vector<1xf32>
          %204 = vector.shape_cast %203 : vector<1xf32> to vector<1x1xf32>
          %205 = vector.broadcast %1 : f32 to vector<1x1xf32>
          %206 = arith.divf %204, %205 : vector<1x1xf32>
          %c5_73 = arith.constant 5 : index
          %c0_74 = arith.constant 0 : index
          %207 = vector.load %arg6[%c5_73, %c0_74] : memref<16x128xf32, #tpu.memory_space<vmem>>, vector<1x128xf32>
          %cst_75 = arith.constant dense<0.000000e+00> : vector<1xf32>
          %208 = vector.multi_reduction <add>, %207, %cst_75 [1] : vector<1x128xf32> to vector<1xf32>
          %209 = vector.shape_cast %208 : vector<1xf32> to vector<1x1xf32>
          %210 = vector.broadcast %1 : f32 to vector<1x1xf32>
          %211 = arith.divf %209, %210 : vector<1x1xf32>
          %212 = vector.broadcast %199 : f32 to vector<1x1xf32>
          %213 = arith.addf %212, %206 : vector<1x1xf32>
          %214 = arith.mulf %206, %206 : vector<1x1xf32>
          %215 = arith.subf %211, %214 : vector<1x1xf32>
          %cst_76 = arith.constant 9.99999974E-6 : f32
          %216 = vector.broadcast %cst_76 : f32 to vector<1x1xf32>
          %217 = arith.addf %215, %216 : vector<1x1xf32>
          %218 = math.rsqrt %217 : vector<1x1xf32>
          %219 = vector.broadcast %200 : f32 to vector<1x1xf32>
          %220 = arith.mulf %219, %218 : vector<1x1xf32>
          %221 = arith.mulf %213, %220 : vector<1x1xf32>
          %222 = vector.broadcast %201 : f32 to vector<1x1xf32>
          %223 = arith.subf %222, %221 : vector<1x1xf32>
          %224 = vector.broadcast %199 : f32 to vector<1x1xf32>
          %225 = arith.mulf %224, %220 : vector<1x1xf32>
          %226 = arith.addf %225, %223 : vector<1x1xf32>
          %c10_77 = arith.constant 10 : index
          %227 = memref.load %arg3[%c10_77] : memref<37xf32, #tpu.memory_space<smem>>
          %cst_78 = arith.constant 0.000000e+00 : f32
          %228 = arith.maximumf %227, %cst_78 : f32
          %229 = arith.mulf %227, %228 : f32
          %c14 = arith.constant 14 : index
          %230 = memref.load %arg3[%c14] : memref<37xf32, #tpu.memory_space<smem>>
          %c18 = arith.constant 18 : index
          %231 = memref.load %arg3[%c18] : memref<37xf32, #tpu.memory_space<smem>>
          %c2_79 = arith.constant 2 : index
          %c0_80 = arith.constant 0 : index
          %232 = vector.load %arg6[%c2_79, %c0_80] : memref<16x128xf32, #tpu.memory_space<vmem>>, vector<1x128xf32>
          %cst_81 = arith.constant dense<0.000000e+00> : vector<1xf32>
          %233 = vector.multi_reduction <add>, %232, %cst_81 [1] : vector<1x128xf32> to vector<1xf32>
          %234 = vector.shape_cast %233 : vector<1xf32> to vector<1x1xf32>
          %235 = vector.broadcast %1 : f32 to vector<1x1xf32>
          %236 = arith.divf %234, %235 : vector<1x1xf32>
          %c6_82 = arith.constant 6 : index
          %c0_83 = arith.constant 0 : index
          %237 = vector.load %arg6[%c6_82, %c0_83] : memref<16x128xf32, #tpu.memory_space<vmem>>, vector<1x128xf32>
          %cst_84 = arith.constant dense<0.000000e+00> : vector<1xf32>
          %238 = vector.multi_reduction <add>, %237, %cst_84 [1] : vector<1x128xf32> to vector<1xf32>
          %239 = vector.shape_cast %238 : vector<1xf32> to vector<1x1xf32>
          %240 = vector.broadcast %1 : f32 to vector<1x1xf32>
          %241 = arith.divf %239, %240 : vector<1x1xf32>
          %242 = vector.broadcast %229 : f32 to vector<1x1xf32>
          %243 = arith.addf %242, %236 : vector<1x1xf32>
          %244 = arith.mulf %236, %236 : vector<1x1xf32>
          %245 = arith.subf %241, %244 : vector<1x1xf32>
          %cst_85 = arith.constant 9.99999974E-6 : f32
          %246 = vector.broadcast %cst_85 : f32 to vector<1x1xf32>
          %247 = arith.addf %245, %246 : vector<1x1xf32>
          %248 = math.rsqrt %247 : vector<1x1xf32>
          %249 = vector.broadcast %230 : f32 to vector<1x1xf32>
          %250 = arith.mulf %249, %248 : vector<1x1xf32>
          %251 = arith.mulf %243, %250 : vector<1x1xf32>
          %252 = vector.broadcast %231 : f32 to vector<1x1xf32>
          %253 = arith.subf %252, %251 : vector<1x1xf32>
          %254 = vector.broadcast %229 : f32 to vector<1x1xf32>
          %255 = arith.mulf %254, %250 : vector<1x1xf32>
          %256 = arith.addf %255, %253 : vector<1x1xf32>
          %c11_86 = arith.constant 11 : index
          %257 = memref.load %arg3[%c11_86] : memref<37xf32, #tpu.memory_space<smem>>
          %cst_87 = arith.constant 0.000000e+00 : f32
          %258 = arith.maximumf %257, %cst_87 : f32
          %259 = arith.mulf %257, %258 : f32
          %c15 = arith.constant 15 : index
          %260 = memref.load %arg3[%c15] : memref<37xf32, #tpu.memory_space<smem>>
          %c19 = arith.constant 19 : index
          %261 = memref.load %arg3[%c19] : memref<37xf32, #tpu.memory_space<smem>>
          %c3_88 = arith.constant 3 : index
          %c0_89 = arith.constant 0 : index
          %262 = vector.load %arg6[%c3_88, %c0_89] : memref<16x128xf32, #tpu.memory_space<vmem>>, vector<1x128xf32>
          %cst_90 = arith.constant dense<0.000000e+00> : vector<1xf32>
          %263 = vector.multi_reduction <add>, %262, %cst_90 [1] : vector<1x128xf32> to vector<1xf32>
          %264 = vector.shape_cast %263 : vector<1xf32> to vector<1x1xf32>
          %265 = vector.broadcast %1 : f32 to vector<1x1xf32>
          %266 = arith.divf %264, %265 : vector<1x1xf32>
          %c7_91 = arith.constant 7 : index
          %c0_92 = arith.constant 0 : index
          %267 = vector.load %arg6[%c7_91, %c0_92] : memref<16x128xf32, #tpu.memory_space<vmem>>, vector<1x128xf32>
          %cst_93 = arith.constant dense<0.000000e+00> : vector<1xf32>
          %268 = vector.multi_reduction <add>, %267, %cst_93 [1] : vector<1x128xf32> to vector<1xf32>
          %269 = vector.shape_cast %268 : vector<1xf32> to vector<1x1xf32>
          %270 = vector.broadcast %1 : f32 to vector<1x1xf32>
          %271 = arith.divf %269, %270 : vector<1x1xf32>
          %272 = vector.broadcast %259 : f32 to vector<1x1xf32>
          %273 = arith.addf %272, %266 : vector<1x1xf32>
          %274 = arith.mulf %266, %266 : vector<1x1xf32>
          %275 = arith.subf %271, %274 : vector<1x1xf32>
          %cst_94 = arith.constant 9.99999974E-6 : f32
          %276 = vector.broadcast %cst_94 : f32 to vector<1x1xf32>
          %277 = arith.addf %275, %276 : vector<1x1xf32>
          %278 = math.rsqrt %277 : vector<1x1xf32>
          %279 = vector.broadcast %260 : f32 to vector<1x1xf32>
          %280 = arith.mulf %279, %278 : vector<1x1xf32>
          %281 = arith.mulf %273, %280 : vector<1x1xf32>
          %282 = vector.broadcast %261 : f32 to vector<1x1xf32>
          %283 = arith.subf %282, %281 : vector<1x1xf32>
          %284 = vector.broadcast %259 : f32 to vector<1x1xf32>
          %285 = arith.mulf %284, %280 : vector<1x1xf32>
          %286 = arith.addf %285, %283 : vector<1x1xf32>
          %c20_95 = arith.constant 20 : index
          %287 = memref.load %arg3[%c20_95] : memref<37xf32, #tpu.memory_space<smem>>
          %288 = vector.broadcast %287 : f32 to vector<1x1xf32>
          %289 = arith.mulf %288, %196 : vector<1x1xf32>
          %c21_96 = arith.constant 21 : index
          %290 = memref.load %arg3[%c21_96] : memref<37xf32, #tpu.memory_space<smem>>
          %291 = vector.broadcast %290 : f32 to vector<1x1xf32>
          %292 = arith.mulf %291, %226 : vector<1x1xf32>
          %293 = arith.addf %289, %292 : vector<1x1xf32>
          %c22_97 = arith.constant 22 : index
          %294 = memref.load %arg3[%c22_97] : memref<37xf32, #tpu.memory_space<smem>>
          %295 = vector.broadcast %294 : f32 to vector<1x1xf32>
          %296 = arith.mulf %295, %256 : vector<1x1xf32>
          %297 = arith.addf %293, %296 : vector<1x1xf32>
          %c23_98 = arith.constant 23 : index
          %298 = memref.load %arg3[%c23_98] : memref<37xf32, #tpu.memory_space<smem>>
          %299 = vector.broadcast %298 : f32 to vector<1x1xf32>
          %300 = arith.mulf %299, %286 : vector<1x1xf32>
          %301 = arith.addf %297, %300 : vector<1x1xf32>
          %c28_99 = arith.constant 28 : index
          %302 = memref.load %arg3[%c28_99] : memref<37xf32, #tpu.memory_space<smem>>
          %303 = vector.broadcast %302 : f32 to vector<1x1xf32>
          %304 = arith.addf %301, %303 : vector<1x1xf32>
          %cst_100 = arith.constant 0.000000e+00 : f32
          %305 = vector.broadcast %cst_100 : f32 to vector<1x1xf32>
          %306 = arith.maximumf %304, %305 : vector<1x1xf32>
          %307 = arith.mulf %304, %306 : vector<1x1xf32>
          %c24_101 = arith.constant 24 : index
          %308 = memref.load %arg3[%c24_101] : memref<37xf32, #tpu.memory_space<smem>>
          %309 = vector.broadcast %308 : f32 to vector<1x1xf32>
          %310 = arith.mulf %309, %196 : vector<1x1xf32>
          %c25_102 = arith.constant 25 : index
          %311 = memref.load %arg3[%c25_102] : memref<37xf32, #tpu.memory_space<smem>>
          %312 = vector.broadcast %311 : f32 to vector<1x1xf32>
          %313 = arith.mulf %312, %226 : vector<1x1xf32>
          %314 = arith.addf %310, %313 : vector<1x1xf32>
          %c26_103 = arith.constant 26 : index
          %315 = memref.load %arg3[%c26_103] : memref<37xf32, #tpu.memory_space<smem>>
          %316 = vector.broadcast %315 : f32 to vector<1x1xf32>
          %317 = arith.mulf %316, %256 : vector<1x1xf32>
          %318 = arith.addf %314, %317 : vector<1x1xf32>
          %c27_104 = arith.constant 27 : index
          %319 = memref.load %arg3[%c27_104] : memref<37xf32, #tpu.memory_space<smem>>
          %320 = vector.broadcast %319 : f32 to vector<1x1xf32>
          %321 = arith.mulf %320, %286 : vector<1x1xf32>
          %322 = arith.addf %318, %321 : vector<1x1xf32>
          %c29_105 = arith.constant 29 : index
          %323 = memref.load %arg3[%c29_105] : memref<37xf32, #tpu.memory_space<smem>>
          %324 = vector.broadcast %323 : f32 to vector<1x1xf32>
          %325 = arith.addf %322, %324 : vector<1x1xf32>
          %cst_106 = arith.constant 0.000000e+00 : f32
          %326 = vector.broadcast %cst_106 : f32 to vector<1x1xf32>
          %327 = arith.maximumf %325, %326 : vector<1x1xf32>
          %328 = arith.mulf %325, %327 : vector<1x1xf32>
          %c30 = arith.constant 30 : index
          %329 = memref.load %arg3[%c30] : memref<37xf32, #tpu.memory_space<smem>>
          %c32 = arith.constant 32 : index
          %330 = memref.load %arg3[%c32] : memref<37xf32, #tpu.memory_space<smem>>
          %c8_107 = arith.constant 8 : index
          %c0_108 = arith.constant 0 : index
          %331 = vector.load %arg6[%c8_107, %c0_108] : memref<16x128xf32, #tpu.memory_space<vmem>>, vector<1x128xf32>
          %cst_109 = arith.constant dense<0.000000e+00> : vector<1xf32>
          %332 = vector.multi_reduction <add>, %331, %cst_109 [1] : vector<1x128xf32> to vector<1xf32>
          %333 = vector.shape_cast %332 : vector<1xf32> to vector<1x1xf32>
          %334 = vector.broadcast %1 : f32 to vector<1x1xf32>
          %335 = arith.divf %333, %334 : vector<1x1xf32>
          %c10_110 = arith.constant 10 : index
          %c0_111 = arith.constant 0 : index
          %336 = vector.load %arg6[%c10_110, %c0_111] : memref<16x128xf32, #tpu.memory_space<vmem>>, vector<1x128xf32>
          %cst_112 = arith.constant dense<0.000000e+00> : vector<1xf32>
          %337 = vector.multi_reduction <add>, %336, %cst_112 [1] : vector<1x128xf32> to vector<1xf32>
          %338 = vector.shape_cast %337 : vector<1xf32> to vector<1x1xf32>
          %339 = vector.broadcast %1 : f32 to vector<1x1xf32>
          %340 = arith.divf %338, %339 : vector<1x1xf32>
          %341 = arith.addf %307, %335 : vector<1x1xf32>
          %342 = arith.mulf %335, %335 : vector<1x1xf32>
          %343 = arith.subf %340, %342 : vector<1x1xf32>
          %cst_113 = arith.constant 9.99999974E-6 : f32
          %344 = vector.broadcast %cst_113 : f32 to vector<1x1xf32>
          %345 = arith.addf %343, %344 : vector<1x1xf32>
          %346 = math.rsqrt %345 : vector<1x1xf32>
          %347 = vector.broadcast %329 : f32 to vector<1x1xf32>
          %348 = arith.mulf %347, %346 : vector<1x1xf32>
          %349 = arith.mulf %341, %348 : vector<1x1xf32>
          %350 = vector.broadcast %330 : f32 to vector<1x1xf32>
          %351 = arith.subf %350, %349 : vector<1x1xf32>
          %352 = vector.shape_cast %348 : vector<1x1xf32> to vector<1x1xf32>
          %353 = vector.broadcast %352 : vector<1x1xf32> to vector<1x128xf32>
          %c8_114 = arith.constant 8 : index
          %c0_115 = arith.constant 0 : index
          %354 = vector.load %arg7[%c8_114, %c0_115] : memref<16x128xf32, #tpu.memory_space<vmem>>, vector<1x128xf32>
          tpu.vector_store %arg7[%c8_114, %c0_115], %353 {strides = array<i32>} : memref<16x128xf32, #tpu.memory_space<vmem>>, vector<1x128xf32>,
          %355 = vector.shape_cast %351 : vector<1x1xf32> to vector<1x1xf32>
          %356 = vector.broadcast %355 : vector<1x1xf32> to vector<1x128xf32>
          %c10_116 = arith.constant 10 : index
          %c0_117 = arith.constant 0 : index
          %357 = vector.load %arg7[%c10_116, %c0_117] : memref<16x128xf32, #tpu.memory_space<vmem>>, vector<1x128xf32>
          tpu.vector_store %arg7[%c10_116, %c0_117], %356 {strides = array<i32>} : memref<16x128xf32, #tpu.memory_space<vmem>>, vector<1x128xf32>,
          %c31 = arith.constant 31 : index
          %358 = memref.load %arg3[%c31] : memref<37xf32, #tpu.memory_space<smem>>
          %c33 = arith.constant 33 : index
          %359 = memref.load %arg3[%c33] : memref<37xf32, #tpu.memory_space<smem>>
          %c9_118 = arith.constant 9 : index
          %c0_119 = arith.constant 0 : index
          %360 = vector.load %arg6[%c9_118, %c0_119] : memref<16x128xf32, #tpu.memory_space<vmem>>, vector<1x128xf32>
          %cst_120 = arith.constant dense<0.000000e+00> : vector<1xf32>
          %361 = vector.multi_reduction <add>, %360, %cst_120 [1] : vector<1x128xf32> to vector<1xf32>
          %362 = vector.shape_cast %361 : vector<1xf32> to vector<1x1xf32>
          %363 = vector.broadcast %1 : f32 to vector<1x1xf32>
          %364 = arith.divf %362, %363 : vector<1x1xf32>
          %c11_121 = arith.constant 11 : index
          %c0_122 = arith.constant 0 : index
          %365 = vector.load %arg6[%c11_121, %c0_122] : memref<16x128xf32, #tpu.memory_space<vmem>>, vector<1x128xf32>
          %cst_123 = arith.constant dense<0.000000e+00> : vector<1xf32>
          %366 = vector.multi_reduction <add>, %365, %cst_123 [1] : vector<1x128xf32> to vector<1xf32>
          %367 = vector.shape_cast %366 : vector<1xf32> to vector<1x1xf32>
          %368 = vector.broadcast %1 : f32 to vector<1x1xf32>
          %369 = arith.divf %367, %368 : vector<1x1xf32>
          %370 = arith.addf %328, %364 : vector<1x1xf32>
          %371 = arith.mulf %364, %364 : vector<1x1xf32>
          %372 = arith.subf %369, %371 : vector<1x1xf32>
          %cst_124 = arith.constant 9.99999974E-6 : f32
          %373 = vector.broadcast %cst_124 : f32 to vector<1x1xf32>
          %374 = arith.addf %372, %373 : vector<1x1xf32>
          %375 = math.rsqrt %374 : vector<1x1xf32>
          %376 = vector.broadcast %358 : f32 to vector<1x1xf32>
          %377 = arith.mulf %376, %375 : vector<1x1xf32>
          %378 = arith.mulf %370, %377 : vector<1x1xf32>
          %379 = vector.broadcast %359 : f32 to vector<1x1xf32>
          %380 = arith.subf %379, %378 : vector<1x1xf32>
          %381 = vector.shape_cast %377 : vector<1x1xf32> to vector<1x1xf32>
          %382 = vector.broadcast %381 : vector<1x1xf32> to vector<1x128xf32>
          %c9_125 = arith.constant 9 : index
          %c0_126 = arith.constant 0 : index
          %383 = vector.load %arg7[%c9_125, %c0_126] : memref<16x128xf32, #tpu.memory_space<vmem>>, vector<1x128xf32>
          tpu.vector_store %arg7[%c9_125, %c0_126], %382 {strides = array<i32>} : memref<16x128xf32, #tpu.memory_space<vmem>>, vector<1x128xf32>,
          %384 = vector.shape_cast %380 : vector<1x1xf32> to vector<1x1xf32>
          %385 = vector.broadcast %384 : vector<1x1xf32> to vector<1x128xf32>
          %c11_127 = arith.constant 11 : index
          %c0_128 = arith.constant 0 : index
          %386 = vector.load %arg7[%c11_127, %c0_128] : memref<16x128xf32, #tpu.memory_space<vmem>>, vector<1x128xf32>
          tpu.vector_store %arg7[%c11_127, %c0_128], %385 {strides = array<i32>} : memref<16x128xf32, #tpu.memory_space<vmem>>, vector<1x128xf32>,
        } else {
        }
      } else {
      }
      %c2_i32 = arith.constant 2 : i32
      %133 = arith.cmpi eq, %arg0, %c2_i32 : i32
      %134 = arith.extui %133 : i1 to i32
      %c0_i32_32 = arith.constant 0 : i32
      %135 = arith.cmpi ne, %134, %c0_i32_32 : i32
      scf.if %135 {
        %c8_33 = arith.constant 8 : index
        %c0_34 = arith.constant 0 : index
        %136 = vector.load %arg7[%c8_33, %c0_34] : memref<16x128xf32, #tpu.memory_space<vmem>>, vector<1x128xf32>
        %137 = vector.broadcast %136 : vector<1x128xf32> to vector<8x128xf32>
        %138 = arith.mulf %108, %137 : vector<8x128xf32>
        %c10_35 = arith.constant 10 : index
        %c0_36 = arith.constant 0 : index
        %139 = vector.load %arg7[%c10_35, %c0_36] : memref<16x128xf32, #tpu.memory_space<vmem>>, vector<1x128xf32>
        %140 = vector.broadcast %139 : vector<1x128xf32> to vector<8x128xf32>
        %141 = arith.addf %138, %140 : vector<8x128xf32>
        %c9_37 = arith.constant 9 : index
        %c0_38 = arith.constant 0 : index
        %142 = vector.load %arg7[%c9_37, %c0_38] : memref<16x128xf32, #tpu.memory_space<vmem>>, vector<1x128xf32>
        %143 = vector.broadcast %142 : vector<1x128xf32> to vector<8x128xf32>
        %144 = arith.mulf %129, %143 : vector<8x128xf32>
        %c11_39 = arith.constant 11 : index
        %c0_40 = arith.constant 0 : index
        %145 = vector.load %arg7[%c11_39, %c0_40] : memref<16x128xf32, #tpu.memory_space<vmem>>, vector<1x128xf32>
        %146 = vector.broadcast %145 : vector<1x128xf32> to vector<8x128xf32>
        %147 = arith.addf %144, %146 : vector<8x128xf32>
        %c34 = arith.constant 34 : index
        %148 = memref.load %arg3[%c34] : memref<37xf32, #tpu.memory_space<smem>>
        %149 = vector.broadcast %148 : f32 to vector<8x128xf32>
        %150 = arith.mulf %149, %141 : vector<8x128xf32>
        %c35 = arith.constant 35 : index
        %151 = memref.load %arg3[%c35] : memref<37xf32, #tpu.memory_space<smem>>
        %152 = vector.broadcast %151 : f32 to vector<8x128xf32>
        %153 = arith.mulf %152, %147 : vector<8x128xf32>
        %154 = arith.addf %150, %153 : vector<8x128xf32>
        %c36 = arith.constant 36 : index
        %155 = memref.load %arg3[%c36] : memref<37xf32, #tpu.memory_space<smem>>
        %156 = vector.broadcast %155 : f32 to vector<8x128xf32>
        %157 = arith.addf %154, %156 : vector<8x128xf32>
        %cst_41 = arith.constant 0.000000e+00 : f32
        %158 = vector.broadcast %cst_41 : f32 to vector<8x128xf32>
        %159 = arith.maximumf %157, %158 : vector<8x128xf32>
        %c0_42 = arith.constant 0 : index
        %c0_43 = arith.constant 0 : index
        %160 = vector.load %arg5[%c0_42, %c0_43] : memref<8x128xf32, #tpu.memory_space<vmem>>, vector<8x128xf32>
        tpu.vector_store %arg5[%c0_42, %c0_43], %159 {strides = array<i32>} : memref<8x128xf32, #tpu.memory_space<vmem>>, vector<8x128xf32>,
      } else {
      }
    } else {
    }
    return
  }
  func.func @transform_0(%arg0: i32, %arg1: i32) -> (i32, i32, i32) {
    %c0_i32 = arith.constant 0 : i32
    %c0_i32_0 = arith.constant 0 : i32
    %c0_i32_1 = arith.constant 0 : i32
    return %c0_i32, %arg1, %c0_i32_0 : i32, i32, i32
  }
  func.func @transform_1(%arg0: i32, %arg1: i32) -> i32 {
    %c0_i32 = arith.constant 0 : i32
    %c0_i32_0 = arith.constant 0 : i32
    return %c0_i32 : i32
  }
  func.func @transform_2(%arg0: i32, %arg1: i32) -> i32 {
    %c0_i32 = arith.constant 0 : i32
    %c0_i32_0 = arith.constant 0 : i32
    return %c0_i32 : i32
  }
  func.func @transform_3(%arg0: i32, %arg1: i32) -> (i32, i32) {
    %c0_i32 = arith.constant 0 : i32
    %c0_i32_0 = arith.constant 0 : i32
    return %arg1, %c0_i32 : i32, i32
  }
}

</mosaic_0001>

<llo_original>
// kernel: tpu_custom_call.1
$region0: #{tpu_custom_call.1}
  #allocation0 [shape = 'u32[]', space=smem, size = 0x4, offset = 0x4, fixed_abs, tag = 'smem constant byte address 0x4 - core index']
  #allocation1 [shape = 'u32[144,128]{1,0:T(1,128)}', space=vmem, size = 0x12000, scoped, tag = 'internal scratch']
  #allocation2 [shape = 'f32[16,128]{1,0:T(8,128)}', space=vmem, size = 0x2000, scoped, tag = 'scratch operand']
  #allocation3 [shape = 'f32[16,128]{1,0:T(8,128)}', space=vmem, size = 0x2000, scoped, tag = 'scratch operand']
  #allocation4 [shape = 's32[1]{0:T(128)S(6)}', space=smem, size = 0x200, scoped, tag = 'scoped memory for tpu_custom_call.1']
  %s0 = inlined_call_operand.hbm [shape: f32[2,8,128], index: 0, kind: input, shape index: {}]
  %s1 = inlined_call_operand.vmem [shape: f32[37], index: 1, kind: input, shape index: {}]
  %s2 = inlined_call_operand.<no memory space> [shape: s32[1], index: 2, kind: input, shape index: {}]
  %s3 = inlined_call_operand.hbm [shape: f32[8,128], index: 3, kind: output, shape index: {}]
  %s4 = sld [smem:[#allocation0]]
  $region81: #{tpu_custom_call.1} parent=0
    _
  %s6 = ssub.s32 1, %s4
  %s7 = scalar_select 0, %s6, %s4
  %8 = sst [smem:[#allocation4]] %s2
  $region1: #{tpu_custom_call.1} parent=0
    #allocation5 [shape = 'u8[8192]{0}', space=vmem, size = 0x2000, scoped, tag = 'input window, operand 0, single buffered']
    #allocation6 [shape = 's32[2]{0}', space=sflag, size = 0x8, scoped, tag = 'scoped memory for tpu_custom_call.1']
    #allocation7 [shape = 's32[2]{0}', space=sflag, size = 0x8, scoped, tag = 'scoped memory for tpu_custom_call.1']
    #allocation8 [shape = 's32[2]{0}', space=sflag, size = 0x8, scoped, tag = 'scoped memory for tpu_custom_call.1']
    #allocation9 [shape = 'u8[512]{0}', space=smem, size = 0x200, scoped, tag = 'input window, operand 1, single buffered']
    #allocation10 [shape = 'u8[4096]{0}', space=vmem, size = 0x1000, scoped, tag = 'output window, operand 0, single buffered']
    %9 = vsyncpa [#allocation6], 0
    %10 = vsyncpa [#allocation8], 0
    %11 = vsyncpa [#allocation7], 0
    loop: start=0, step=1, limit=5
    $region2: #{tpu_custom_call.1} parent=1 // loop_pre_header
      _
    $region3: #{tpu_custom_call.1} parent=1 // loop_header
      %s13 = sphi 0, %s17
      %p14 = scmp.ge.s32.totalorder %s13, 5
      %s20 = sphi 0, %s32
      %s21 = sphi 0, %s28
      %s22 = sphi 0, %s20
      %s23 = sphi 0, %s21
      %s24 = sphi 0, %s22
      %s25 = sphi 0, %s23
      %s35 = sphi 0, %s37
      %s38 = sphi 0, %s35
      %s39 = sphi 0, %s38
      %s55 = sphi 0, %s39
      %s59 = sphi 0, %s59
      %s61 = sphi 0, %s59
      %s62 = sphi 0, %s61
      %s76 = sphi 0, %s62
      %s80 = sphi 0, %s80
      %s82 = sphi 0, %s80
      %s83 = sphi 0, %s82
      %s97 = sphi 0, %s83
      %s103 = sphi 0, %s105
      %s106 = sphi 0, %s103
      %s107 = sphi 0, %s106
      %s123 = sphi 0, %s107
    $region4: #{tpu_custom_call.1} parent=1 // loop_header_branch
      %16 = sbr.rel (%p14) target = $region8
    $region5: #{tpu_custom_call.1} parent=1 // loop_body
      %s18 = ssub.s32 %s13, 1
      %s19 = ssub.s32 %s13, 2
      %s26 = sadd.s32 1, %s21
      %p27 = scmp.ge.s32.totalorder %s26, 1
      %s28 = scalar_select %p27, 0, %s26
      %s29 = sadd.s32 1, %s20
      %s30 = scalar_select %p27, %s29, %s20
      %p31 = scmp.ge.s32.totalorder %s30, 3
      %s32 = scalar_select %p31, 0, %s30
      %s33 = ssub.s32 %s21, %s28
      %p34 = scmp.eq.s32.totalorder %s33, 0
      %s36 = sadd.s32 %s35, 1
      %s37 = scalar_select %p34, %s35, %s36
      %p40 = pneg %p34
      %p41 = scmp.eq.s32.totalorder %s13, 2
      %p42 = por %p40, %p41
      %p43 = scmp.ne.s32.totalorder %s35, %s38
      %p44 = scmp.eq.s32.totalorder %s13, 0
      %p45 = por %p43, %p44
      %p46 = scmp.ne.s32.totalorder %s35, %s38
      %p47 = scmp.eq.s32.totalorder %s18, 2
      %p48 = por %p46, %p47
      %p49 = scmp.ne.s32.totalorder %s38, %s39
      %p50 = scmp.eq.s32.totalorder %s18, 0
      %p51 = por %p49, %p50
      %p52 = scmp.ne.s32.totalorder %s38, %s39
      %p53 = scmp.eq.s32.totalorder %s19, 2
      %p54 = por %p52, %p53
      %p56 = scmp.ne.s32.totalorder %s39, %s55
      %p57 = scmp.eq.s32.totalorder %s19, 0
      %p58 = por %p56, %p57
      %s60 = sadd.s32 %s59, 1
      %p63 = scmp.eq.s32.totalorder %s13, 2
      %p64 = scmp.ne.s32.totalorder %s59, %s61
      %p65 = scmp.eq.s32.totalorder %s13, 0
      %p66 = por %p64, %p65
      %p67 = scmp.ne.s32.totalorder %s59, %s61
      %p68 = scmp.eq.s32.totalorder %s18, 2
      %p69 = por %p67, %p68
      %p70 = scmp.ne.s32.totalorder %s61, %s62
      %p71 = scmp.eq.s32.totalorder %s18, 0
      %p72 = por %p70, %p71
      %p73 = scmp.ne.s32.totalorder %s61, %s62
      %p74 = scmp.eq.s32.totalorder %s19, 2
      %p75 = por %p73, %p74
      %p77 = scmp.ne.s32.totalorder %s62, %s76
      %p78 = scmp.eq.s32.totalorder %s19, 0
      %p79 = por %p77, %p78
      %s81 = sadd.s32 %s80, 1
      %p84 = scmp.eq.s32.totalorder %s13, 2
      %p85 = scmp.ne.s32.totalorder %s80, %s82
      %p86 = scmp.eq.s32.totalorder %s13, 0
      %p87 = por %p85, %p86
      %p88 = scmp.ne.s32.totalorder %s80, %s82
      %p89 = scmp.eq.s32.totalorder %s18, 2
      %p90 = por %p88, %p89
      %p91 = scmp.ne.s32.totalorder %s82, %s83
      %p92 = scmp.eq.s32.totalorder %s18, 0
      %p93 = por %p91, %p92
      %p94 = scmp.ne.s32.totalorder %s82, %s83
      %p95 = scmp.eq.s32.totalorder %s19, 2
      %p96 = por %p94, %p95
      %p98 = scmp.ne.s32.totalorder %s83, %s97
      %p99 = scmp.eq.s32.totalorder %s19, 0
      %p100 = por %p98, %p99
      %s101 = ssub.s32 %s21, %s28
      %p102 = scmp.eq.s32.totalorder %s101, 0
      %s104 = sadd.s32 %s103, 1
      %s105 = scalar_select %p102, %s103, %s104
      %p108 = pneg %p102
      %p109 = scmp.eq.s32.totalorder %s13, 2
      %p110 = por %p108, %p109
      %p111 = scmp.ne.s32.totalorder %s103, %s106
      %p112 = scmp.eq.s32.totalorder %s13, 0
      %p113 = por %p111, %p112
      %p114 = scmp.ne.s32.totalorder %s103, %s106
      %p115 = scmp.eq.s32.totalorder %s18, 2
      %p116 = por %p114, %p115
      %p117 = scmp.ne.s32.totalorder %s106, %s107
      %p118 = scmp.eq.s32.totalorder %s18, 0
      %p119 = por %p117, %p118
      %p120 = scmp.ne.s32.totalorder %s106, %s107
      %p121 = scmp.eq.s32.totalorder %s19, 2
      %p122 = por %p120, %p121
      %p124 = scmp.ne.s32.totalorder %s107, %s123
      %p125 = scmp.eq.s32.totalorder %s19, 0
      %p126 = por %p124, %p125
      %p127 = scmp.le.s32.totalorder 1, %s13
      %p128 = scmp.lt.s32.totalorder %s13, 4
      %p129 = pnand %p127, %p128
      %p130 = pneg %p129
      // Predicated region
      $region9: #{tpu_custom_call.1} parent=5 // pred_check
        _
      $region10: #{tpu_custom_call.1} parent=5 // pred_check_branch
        %132 = sbr.rel (%p129) target = $region12
      $region11: #{tpu_custom_call.1} parent=5 // pred_region
        %s133 = ssub.s32 %s13, 1
        // Predicated region
        $region13: #{tpu_custom_call.1} parent=11 // pred_check
          %p134 = pneg %p51
        $region14: #{tpu_custom_call.1} parent=11 // pred_check_branch
          %136 = sbr.rel (%p134) target = $region16
        $region15: #{tpu_custom_call.1} parent=11 // pred_region
          %s138 = ssub.s32 256, 256
          %139 = vsyncadd [#allocation6], %s138
          %s140 = smul.addr %s23, 128
          %s141 = scalar_lea.hbm %s0, %s140
          %s142 = sshll.u32 [#allocation5], 4
          %s143 = int_to_ptr.vmem [resolvable:$true] %s142
          %148 = dma.hbm_to_vmem [thread:$0]  %s141, 256, %s143, [#allocation6], 128, 128, 8
        $region16: #{tpu_custom_call.1} parent=11 // pred_fallthru
          _
        // Predicated region
        $region17: #{tpu_custom_call.1} parent=11 // pred_check
          %p149 = pneg %p72
        $region18: #{tpu_custom_call.1} parent=11 // pred_check_branch
          %151 = sbr.rel (%p149) target = $region20
        $region19: #{tpu_custom_call.1} parent=11 // pred_region
          %s153 = ssub.s32 16, 16
          %154 = vsyncadd [#allocation8], %s153
          %s156 = sshll.u32 %s1, 4
          %s157 = int_to_ptr.vmem [resolvable:$true] %s156
          %159 = dma.vmem_to_smem %s157, 16, [#allocation9], [#allocation8]
        $region20: #{tpu_custom_call.1} parent=11 // pred_fallthru
          _
        // Predicated region
        $region21: #{tpu_custom_call.1} parent=11 // pred_check
          %p160 = pneg %p93
        $region22: #{tpu_custom_call.1} parent=11 // pred_check_branch
          %162 = sbr.rel (%p160) target = $region24
        $region23: #{tpu_custom_call.1} parent=11 // pred_region
          _
        $region24: #{tpu_custom_call.1} parent=11 // pred_fallthru
          _
      $region12: #{tpu_custom_call.1} parent=5 // pred_fallthru
        _
      %p163 = scmp.lt.s32.totalorder %s13, 3
      // Predicated region
      $region25: #{tpu_custom_call.1} parent=5 // pred_check
        %p164 = pneg %p163
      $region26: #{tpu_custom_call.1} parent=5 // pred_check_branch
        %166 = sbr.rel (%p164) target = $region28
      $region27: #{tpu_custom_call.1} parent=5 // pred_region
        _
      $region28: #{tpu_custom_call.1} parent=5 // pred_fallthru
        _
      %p167 = scmp.le.s32.totalorder 1, %s13
      %p168 = scmp.lt.s32.totalorder %s13, 4
      %p169 = pnand %p167, %p168
      %p170 = pneg %p169
      // Predicated region
      $region29: #{tpu_custom_call.1} parent=5 // pred_check
        _
      $region30: #{tpu_custom_call.1} parent=5 // pred_check_branch
        %172 = sbr.rel (%p169) target = $region32
      $region31: #{tpu_custom_call.1} parent=5 // pred_region
        %s173 = ssub.s32 %s13, 1
        // Predicated region
        $region33: #{tpu_custom_call.1} parent=31 // pred_check
          %p174 = pneg %p51
        $region34: #{tpu_custom_call.1} parent=31 // pred_check_branch
          %176 = sbr.rel (%p174) target = $region36
        $region35: #{tpu_custom_call.1} parent=31 // pred_region
          %177 = dma.done [#allocation6], 256
        $region36: #{tpu_custom_call.1} parent=31 // pred_fallthru
          _
        // Predicated region
        $region37: #{tpu_custom_call.1} parent=31 // pred_check
          %p178 = pneg %p72
        $region38: #{tpu_custom_call.1} parent=31 // pred_check_branch
          %180 = sbr.rel (%p178) target = $region40
        $region39: #{tpu_custom_call.1} parent=31 // pred_region
          %181 = dma.done [#allocation8], 16
        $region40: #{tpu_custom_call.1} parent=31 // pred_fallthru
          _
        %182 = sfence
        %p183 = pneg %p51
        %p184 = pneg %p48
        %p185 = pneg %p72
        %p186 = pneg %p69
        %p187 = pneg %p93
        %p188 = pneg %p90
        %p189 = pneg %p119
        %p190 = pneg %p116
        %s191 = sld [smem:[#allocation4]]
        %s192 = scvt.s32.f32 %s191
        %v193 = vld [vmem:[#allocation5] sm:$0xff]
        %s194 = scalar_lea.vmem [#allocation5], 8
        %v195 = vld [vmem:[%s194] sm:$0xff]
        %s196 = sld [smem:[#allocation9]]
        %v197 = vstv %s196
        %v198 = vmul.f32 %v197, %v193
        %s199 = sld [smem:[#allocation9 + $0x1]]
        %v200 = vstv %s199
        %v201 = vmul.f32 %v200, %v195
        %v202 = vadd.f32 %v198, %v201
        %s203 = sld [smem:[#allocation9 + $0x8]]
        %v204 = vstv %s203
        %v205 = vadd.f32 %v202, %v204
        %v206 = vmax.f32 %v205, 0.0
        %v207 = vmul.f32 %v205, %v206
        %s208 = sld [smem:[#allocation9 + $0x2]]
        %v209 = vstv %s208
        %v210 = vmul.f32 %v209, %v193
        %s211 = sld [smem:[#allocation9 + $0x3]]
        %v212 = vstv %s211
        %v213 = vmul.f32 %v212, %v195
        %v214 = vadd.f32 %v210, %v213
        %s215 = sld [smem:[#allocation9 + $0x9]]
        %v216 = vstv %s215
        %v217 = vadd.f32 %v214, %v216
        %v218 = vmax.f32 %v217, 0.0
        %v219 = vmul.f32 %v217, %v218
        %s220 = sld [smem:[#allocation9 + $0x4]]
        %v221 = vstv %s220
        %v222 = vmul.f32 %v221, %v193
        %s223 = sld [smem:[#allocation9 + $0x5]]
        %v224 = vstv %s223
        %v225 = vmul.f32 %v224, %v195
        %v226 = vadd.f32 %v222, %v225
        %s227 = sld [smem:[#allocation9 + $0xa]]
        %v228 = vstv %s227
        %v229 = vadd.f32 %v226, %v228
        %v230 = vmax.f32 %v229, 0.0
        %v231 = vmul.f32 %v229, %v230
        %s232 = sld [smem:[#allocation9 + $0x6]]
        %v233 = vstv %s232
        %v234 = vmul.f32 %v233, %v193
        %s235 = sld [smem:[#allocation9 + $0x7]]
        %v236 = vstv %s235
        %v237 = vmul.f32 %v236, %v195
        %v238 = vadd.f32 %v234, %v237
        %s239 = sld [smem:[#allocation9 + $0xb]]
        %v240 = vstv %s239
        %v241 = vadd.f32 %v238, %v240
        %v242 = vmax.f32 %v241, 0.0
        %v243 = vmul.f32 %v241, %v242
        %p244 = scmp.eq.s32.totalorder %s22, 0
        // Predicated region
        $region41: #{tpu_custom_call.1} parent=31 // pred_check
          %p245 = pneg %p244
        $region42: #{tpu_custom_call.1} parent=31 // pred_check_branch
          %247 = sbr.rel (%p245) target = $region44
        $region43: #{tpu_custom_call.1} parent=31 // pred_region
          %p248 = scmp.eq.s32.totalorder %s23, 0
          // Predicated region
          $region45: #{tpu_custom_call.1} parent=43 // pred_check
            %p249 = pneg %p248
          $region46: #{tpu_custom_call.1} parent=43 // pred_check_branch
            %251 = sbr.rel (%p249) target = $region48
          $region47: #{tpu_custom_call.1} parent=43 // pred_region
            %252 = vst [vmem:[#allocation2] sm:$0xff] 0.0
            %253 = vst [vmem:[#allocation2 + $0x8] sm:$0xff] 0.0
          $region48: #{tpu_custom_call.1} parent=43 // pred_fallthru
            _
          %s254 = sld [smem:[#allocation9 + $0x8]]
          %s255 = smax.f32 %s254, 0.0
          %s256 = smul.f32 %s254, %s255
          %v257 = vstv %s256
          %v258 = vsub.f32 %v207, %v257
          %v259 = vld [vmem:[#allocation2] sm:$0x1]
          %v260 = vrot.slane %v258, 4
          %v261 = vadd.f32 %v258, %v260
          %v262 = vrot.slane %v261, 2
          %v263 = vadd.f32 %v261, %v262
          %v264 = vrot.slane %v263, 1
          %v265 = vadd.f32 %v263, %v264
          %v266 = vadd.f32 %v259, %v265
          %267 = vst [vmem:[#allocation2] sm:$0x1] %v266
          %v268 = vld [vmem:[#allocation2 + $0x4] sm:$0x1]
          %v269 = vmul.f32 %v258, %v258
          %v270 = vrot.slane %v269, 4
          %v271 = vadd.f32 %v269, %v270
          %v272 = vrot.slane %v271, 2
          %v273 = vadd.f32 %v271, %v272
          %v274 = vrot.slane %v273, 1
          %v275 = vadd.f32 %v273, %v274
          %v276 = vadd.f32 %v268, %v275
          %277 = vst [vmem:[#allocation2 + $0x4] sm:$0x1] %v276
          %s278 = sld [smem:[#allocation9 + $0x9]]
          %s279 = smax.f32 %s278, 0.0
          %s280 = smul.f32 %s278, %s279
          %v281 = vstv %s280
          %v282 = vsub.f32 %v219, %v281
          %v283 = vld [vmem:[#allocation2 + $0x1] sm:$0x1]
          %v284 = vrot.slane %v282, 4
          %v285 = vadd.f32 %v282, %v284
          %v286 = vrot.slane %v285, 2
          %v287 = vadd.f32 %v285, %v286
          %v288 = vrot.slane %v287, 1
          %v289 = vadd.f32 %v287, %v288
          %v290 = vadd.f32 %v283, %v289
          %291 = vst [vmem:[#allocation2 + $0x1] sm:$0x1] %v290
          %v292 = vld [vmem:[#allocation2 + $0x5] sm:$0x1]
          %v293 = vmul.f32 %v282, %v282
          %v294 = vrot.slane %v293, 4
          %v295 = vadd.f32 %v293, %v294
          %v296 = vrot.slane %v295, 2
          %v297 = vadd.f32 %v295, %v296
          %v298 = vrot.slane %v297, 1
          %v299 = vadd.f32 %v297, %v298
          %v300 = vadd.f32 %v292, %v299
          %301 = vst [vmem:[#allocation2 + $0x5] sm:$0x1] %v300
          %s302 = sld [smem:[#allocation9 + $0xa]]
          %s303 = smax.f32 %s302, 0.0
          %s304 = smul.f32 %s302, %s303
          %v305 = vstv %s304
          %v306 = vsub.f32 %v231, %v305
          %v307 = vld [vmem:[#allocation2 + $0x2] sm:$0x1]
          %v308 = vrot.slane %v306, 4
          %v309 = vadd.f32 %v306, %v308
          %v310 = vrot.slane %v309, 2
          %v311 = vadd.f32 %v309, %v310
          %v312 = vrot.slane %v311, 1
          %v313 = vadd.f32 %v311, %v312
          %v314 = vadd.f32 %v307, %v313
          %315 = vst [vmem:[#allocation2 + $0x2] sm:$0x1] %v314
          %v316 = vld [vmem:[#allocation2 + $0x6] sm:$0x1]
          %v317 = vmul.f32 %v306, %v306
          %v318 = vrot.slane %v317, 4
          %v319 = vadd.f32 %v317, %v318
          %v320 = vrot.slane %v319, 2
          %v321 = vadd.f32 %v319, %v320
          %v322 = vrot.slane %v321, 1
          %v323 = vadd.f32 %v321, %v322
          %v324 = vadd.f32 %v316, %v323
          %325 = vst [vmem:[#allocation2 + $0x6] sm:$0x1] %v324
          %s326 = sld [smem:[#allocation9 + $0xb]]
          %s327 = smax.f32 %s326, 0.0
          %s328 = smul.f32 %s326, %s327
          %v329 = vstv %s328
          %v330 = vsub.f32 %v243, %v329
          %v331 = vld [vmem:[#allocation2 + $0x3] sm:$0x1]
          %v332 = vrot.slane %v330, 4
          %v333 = vadd.f32 %v330, %v332
          %v334 = vrot.slane %v333, 2
          %v335 = vadd.f32 %v333, %v334
          %v336 = vrot.slane %v335, 1
          %v337 = vadd.f32 %v335, %v336
          %v338 = vadd.f32 %v331, %v337
          %339 = vst [vmem:[#allocation2 + $0x3] sm:$0x1] %v338
          %v340 = vld [vmem:[#allocation2 + $0x7] sm:$0x1]
          %v341 = vmul.f32 %v330, %v330
          %v342 = vrot.slane %v341, 4
          %v343 = vadd.f32 %v341, %v342
          %v344 = vrot.slane %v343, 2
          %v345 = vadd.f32 %v343, %v344
          %v346 = vrot.slane %v345, 1
          %v347 = vadd.f32 %v345, %v346
          %v348 = vadd.f32 %v340, %v347
          %349 = vst [vmem:[#allocation2 + $0x7] sm:$0x1] %v348
          // Predicated region
          $region49: #{tpu_custom_call.1} parent=43 // pred_check
            %p350 = pneg %p248
          $region50: #{tpu_custom_call.1} parent=43 // pred_check_branch
            %352 = sbr.rel (%p350) target = $region52
          $region51: #{tpu_custom_call.1} parent=43 // pred_region
            %s353 = sld [smem:[#allocation9 + $0x8]]
            %s354 = smax.f32 %s353, 0.0
            %s355 = smul.f32 %s353, %s354
            %s356 = sld [smem:[#allocation9 + $0xc]]
            %s357 = sld [smem:[#allocation9 + $0x10]]
            %v358 = vld [vmem:[#allocation2] sm:$0x1]
            %vm359 = vcmask 1040384
            %v360 = vsel %vm359, %v358, 0.0
            %361 = vadd.xlane.f32.xlu0 %v360
            %v362 = vpop.xlane.xlu0 %361
            %v363 = vstv %s192
            %v364 = vrcp.pop %v363
            %v365 = vmul.f32 %v362, %v364
            %v366 = vld [vmem:[#allocation2 + $0x4] sm:$0x1]
            %v367 = vsel %vm359, %v366, 0.0
            %368 = vadd.xlane.f32.xlu0 %v367
            %v369 = vpop.xlane.xlu0 %368
            %v370 = vmul.f32 %v369, %v364
            %v371 = vstv %s355
            %v372 = vadd.f32 %v371, %v365
            %v373 = vmul.f32 %v365, %v365
            %v374 = vsub.f32 %v370, %v373
            %v375 = vadd.f32 %v374, 1e-05
            %v376 = vrsqrt.pop %v375
            %v377 = vstv %s356
            %v378 = vmul.f32 %v377, %v376
            %v379 = vmul.f32 %v372, %v378
            %v380 = vstv %s357
            %v381 = vsub.f32 %v380, %v379
            %v382 = vmul.f32 %v371, %v378
            %v383 = vadd.f32 %v382, %v381
            %s384 = sld [smem:[#allocation9 + $0x9]]
            %s385 = smax.f32 %s384, 0.0
            %s386 = smul.f32 %s384, %s385
            %s387 = sld [smem:[#allocation9 + $0xd]]
            %s388 = sld [smem:[#allocation9 + $0x11]]
            %v389 = vld [vmem:[#allocation2 + $0x1] sm:$0x1]
            %v390 = vsel %vm359, %v389, 0.0
            %391 = vadd.xlane.f32.xlu0 %v390
            %v392 = vpop.xlane.xlu0 %391
            %v393 = vmul.f32 %v392, %v364
            %v394 = vld [vmem:[#allocation2 + $0x5] sm:$0x1]
            %v395 = vsel %vm359, %v394, 0.0
            %396 = vadd.xlane.f32.xlu0 %v395
            %v397 = vpop.xlane.xlu0 %396
            %v398 = vmul.f32 %v397, %v364
            %v399 = vstv %s386
            %v400 = vadd.f32 %v399, %v393
            %v401 = vmul.f32 %v393, %v393
            %v402 = vsub.f32 %v398, %v401
            %v403 = vadd.f32 %v402, 1e-05
            %v404 = vrsqrt.pop %v403
            %v405 = vstv %s387
            %v406 = vmul.f32 %v405, %v404
            %v407 = vmul.f32 %v400, %v406
            %v408 = vstv %s388
            %v409 = vsub.f32 %v408, %v407
            %v410 = vmul.f32 %v399, %v406
            %v411 = vadd.f32 %v410, %v409
            %s412 = sld [smem:[#allocation9 + $0xa]]
            %s413 = smax.f32 %s412, 0.0
            %s414 = smul.f32 %s412, %s413
            %s415 = sld [smem:[#allocation9 + $0xe]]
            %s416 = sld [smem:[#allocation9 + $0x12]]
            %v417 = vld [vmem:[#allocation2 + $0x2] sm:$0x1]
            %v418 = vsel %vm359, %v417, 0.0
            %419 = vadd.xlane.f32.xlu0 %v418
            %v420 = vpop.xlane.xlu0 %419
            %v421 = vmul.f32 %v420, %v364
            %v422 = vld [vmem:[#allocation2 + $0x6] sm:$0x1]
            %v423 = vsel %vm359, %v422, 0.0
            %424 = vadd.xlane.f32.xlu0 %v423
            %v425 = vpop.xlane.xlu0 %424
            %v426 = vmul.f32 %v425, %v364
            %v427 = vstv %s414
            %v428 = vadd.f32 %v427, %v421
            %v429 = vmul.f32 %v421, %v421
            %v430 = vsub.f32 %v426, %v429
            %v431 = vadd.f32 %v430, 1e-05
            %v432 = vrsqrt.pop %v431
            %v433 = vstv %s415
            %v434 = vmul.f32 %v433, %v432
            %v435 = vmul.f32 %v428, %v434
            %v436 = vstv %s416
            %v437 = vsub.f32 %v436, %v435
            %v438 = vmul.f32 %v427, %v434
            %v439 = vadd.f32 %v438, %v437
            %s440 = sld [smem:[#allocation9 + $0xb]]
            %s441 = smax.f32 %s440, 0.0
            %s442 = smul.f32 %s440, %s441
            %s443 = sld [smem:[#allocation9 + $0xf]]
            %s444 = sld [smem:[#allocation9 + $0x13]]
            %v445 = vld [vmem:[#allocation2 + $0x3] sm:$0x1]
            %v446 = vsel %vm359, %v445, 0.0
            %447 = vadd.xlane.f32.xlu0 %v446
            %v448 = vpop.xlane.xlu0 %447
            %v449 = vmul.f32 %v448, %v364
            %v450 = vld [vmem:[#allocation2 + $0x7] sm:$0x1]
            %v451 = vsel %vm359, %v450, 0.0
            %452 = vadd.xlane.f32.xlu0 %v451
            %v453 = vpop.xlane.xlu0 %452
            %v454 = vmul.f32 %v453, %v364
            %v455 = vstv %s442
            %v456 = vadd.f32 %v455, %v449
            %v457 = vmul.f32 %v449, %v449
            %v458 = vsub.f32 %v454, %v457
            %v459 = vadd.f32 %v458, 1e-05
            %v460 = vrsqrt.pop %v459
            %v461 = vstv %s443
            %v462 = vmul.f32 %v461, %v460
            %v463 = vmul.f32 %v456, %v462
            %v464 = vstv %s444
            %v465 = vsub.f32 %v464, %v463
            %v466 = vmul.f32 %v455, %v462
            %v467 = vadd.f32 %v466, %v465
            %s468 = sld [smem:[#allocation9 + $0x14]]
            %v469 = vstv %s468
            %v470 = vmul.f32 %v469, %v383
            %s471 = sld [smem:[#allocation9 + $0x15]]
            %v472 = vstv %s471
            %v473 = vmul.f32 %v472, %v411
            %v474 = vadd.f32 %v470, %v473
            %s475 = sld [smem:[#allocation9 + $0x16]]
            %v476 = vstv %s475
            %v477 = vmul.f32 %v476, %v439
            %v478 = vadd.f32 %v474, %v477
            %s479 = sld [smem:[#allocation9 + $0x17]]
            %v480 = vstv %s479
            %v481 = vmul.f32 %v480, %v467
            %v482 = vadd.f32 %v478, %v481
            %s483 = sld [smem:[#allocation9 + $0x1c]]
            %v484 = vstv %s483
            %v485 = vadd.f32 %v482, %v484
            %v486 = vmax.f32 %v485, 0.0
            %v487 = vmul.f32 %v485, %v486
            %s488 = sld [smem:[#allocation9 + $0x18]]
            %v489 = vstv %s488
            %v490 = vmul.f32 %v489, %v383
            %s491 = sld [smem:[#allocation9 + $0x19]]
            %v492 = vstv %s491
            %v493 = vmul.f32 %v492, %v411
            %v494 = vadd.f32 %v490, %v493
            %s495 = sld [smem:[#allocation9 + $0x1a]]
            %v496 = vstv %s495
            %v497 = vmul.f32 %v496, %v439
            %v498 = vadd.f32 %v494, %v497
            %s499 = sld [smem:[#allocation9 + $0x1b]]
            %v500 = vstv %s499
            %v501 = vmul.f32 %v500, %v467
            %v502 = vadd.f32 %v498, %v501
            %s503 = sld [smem:[#allocation9 + $0x1d]]
            %v504 = vstv %s503
            %v505 = vadd.f32 %v502, %v504
            %v506 = vmax.f32 %v505, 0.0
            %v507 = vmul.f32 %v505, %v506
            %508 = vst [vmem:[#allocation3] sm:$0x1] %v378
            %509 = vst [vmem:[#allocation3 + $0x4] sm:$0x1] %v381
            %510 = vst [vmem:[#allocation3 + $0x1] sm:$0x1] %v406
            %511 = vst [vmem:[#allocation3 + $0x5] sm:$0x1] %v409
            %512 = vst [vmem:[#allocation3 + $0x2] sm:$0x1] %v434
            %513 = vst [vmem:[#allocation3 + $0x6] sm:$0x1] %v437
            %514 = vst [vmem:[#allocation3 + $0x3] sm:$0x1] %v462
            %515 = vst [vmem:[#allocation3 + $0x7] sm:$0x1] %v465
            %516 = vst [vmem:[#allocation3 + $0xc] sm:$0x1] %v487
            %517 = vst [vmem:[#allocation3 + $0xd] sm:$0x1] %v507
          $region52: #{tpu_custom_call.1} parent=43 // pred_fallthru
            _
        $region44: #{tpu_custom_call.1} parent=31 // pred_fallthru
          _
        %p518 = scmp.ge.s32.totalorder %s22, 1
        // Predicated region
        $region53: #{tpu_custom_call.1} parent=31 // pred_check
          %p519 = pneg %p518
        $region54: #{tpu_custom_call.1} parent=31 // pred_check_branch
          %521 = sbr.rel (%p519) target = $region56
        $region55: #{tpu_custom_call.1} parent=31 // pred_region
          %v522 = vld [vmem:[#allocation3] sm:$0x1]
          %v523 = vlaneseq
          %v524 = vshrl.u32 %v523, 7
          %v525 = vsub.s32 0, %v524
          %v526 = vrot.slane %v522, %v525
          %v527 = vmul.f32 %v207, %v526
          %v528 = vld [vmem:[#allocation3 + $0x4] sm:$0x1]
          %v529 = vlaneseq
          %v530 = vshrl.u32 %v529, 7
          %v531 = vsub.s32 0, %v530
          %v532 = vrot.slane %v528, %v531
          %v533 = vadd.f32 %v527, %v532
          %v534 = vld [vmem:[#allocation3 + $0x1] sm:$0x1]
          %v535 = vlaneseq
          %v536 = vshrl.u32 %v535, 7
          %v537 = vsub.s32 0, %v536
          %v538 = vrot.slane %v534, %v537
          %v539 = vmul.f32 %v219, %v538
          %v540 = vld [vmem:[#allocation3 + $0x5] sm:$0x1]
          %v541 = vlaneseq
          %v542 = vshrl.u32 %v541, 7
          %v543 = vsub.s32 0, %v542
          %v544 = vrot.slane %v540, %v543
          %v545 = vadd.f32 %v539, %v544
          %v546 = vld [vmem:[#allocation3 + $0x2] sm:$0x1]
          %v547 = vlaneseq
          %v548 = vshrl.u32 %v547, 7
          %v549 = vsub.s32 0, %v548
          %v550 = vrot.slane %v546, %v549
          %v551 = vmul.f32 %v231, %v550
          %v552 = vld [vmem:[#allocation3 + $0x6] sm:$0x1]
          %v553 = vlaneseq
          %v554 = vshrl.u32 %v553, 7
          %v555 = vsub.s32 0, %v554
          %v556 = vrot.slane %v552, %v555
          %v557 = vadd.f32 %v551, %v556
          %v558 = vld [vmem:[#allocation3 + $0x3] sm:$0x1]
          %v559 = vlaneseq
          %v560 = vshrl.u32 %v559, 7
          %v561 = vsub.s32 0, %v560
          %v562 = vrot.slane %v558, %v561
          %v563 = vmul.f32 %v243, %v562
          %v564 = vld [vmem:[#allocation3 + $0x7] sm:$0x1]
          %v565 = vlaneseq
          %v566 = vshrl.u32 %v565, 7
          %v567 = vsub.s32 0, %v566
          %v568 = vrot.slane %v564, %v567
          %v569 = vadd.f32 %v563, %v568
          %s570 = sld [smem:[#allocation9 + $0x14]]
          %v571 = vstv %s570
          %v572 = vmul.f32 %v571, %v533
          %s573 = sld [smem:[#allocation9 + $0x15]]
          %v574 = vstv %s573
          %v575 = vmul.f32 %v574, %v545
          %v576 = vadd.f32 %v572, %v575
          %s577 = sld [smem:[#allocation9 + $0x16]]
          %v578 = vstv %s577
          %v579 = vmul.f32 %v578, %v557
          %v580 = vadd.f32 %v576, %v579
          %s581 = sld [smem:[#allocation9 + $0x17]]
          %v582 = vstv %s581
          %v583 = vmul.f32 %v582, %v569
          %v584 = vadd.f32 %v580, %v583
          %s585 = sld [smem:[#allocation9 + $0x1c]]
          %v586 = vstv %s585
          %v587 = vadd.f32 %v584, %v586
          %v588 = vmax.f32 %v587, 0.0
          %v589 = vmul.f32 %v587, %v588
          %s590 = sld [smem:[#allocation9 + $0x18]]
          %v591 = vstv %s590
          %v592 = vmul.f32 %v591, %v533
          %s593 = sld [smem:[#allocation9 + $0x19]]
          %v594 = vstv %s593
          %v595 = vmul.f32 %v594, %v545
          %v596 = vadd.f32 %v592, %v595
          %s597 = sld [smem:[#allocation9 + $0x1a]]
          %v598 = vstv %s597
          %v599 = vmul.f32 %v598, %v557
          %v600 = vadd.f32 %v596, %v599
          %s601 = sld [smem:[#allocation9 + $0x1b]]
          %v602 = vstv %s601
          %v603 = vmul.f32 %v602, %v569
          %v604 = vadd.f32 %v600, %v603
          %s605 = sld [smem:[#allocation9 + $0x1d]]
          %v606 = vstv %s605
          %v607 = vadd.f32 %v604, %v606
          %v608 = vmax.f32 %v607, 0.0
          %v609 = vmul.f32 %v607, %v608
          %p610 = scmp.eq.s32.totalorder %s22, 1
          // Predicated region
          $region57: #{tpu_custom_call.1} parent=55 // pred_check
            %p611 = pneg %p610
          $region58: #{tpu_custom_call.1} parent=55 // pred_check_branch
            %613 = sbr.rel (%p611) target = $region60
          $region59: #{tpu_custom_call.1} parent=55 // pred_region
            %v614 = vld [vmem:[#allocation3 + $0xc] sm:$0x1]
            %v615 = vlaneseq
            %v616 = vshrl.u32 %v615, 7
            %v617 = vsub.s32 0, %v616
            %v618 = vrot.slane %v614, %v617
            %v619 = vsub.f32 %v589, %v618
            %v620 = vld [vmem:[#allocation2 + $0x8] sm:$0x1]
            %v621 = vrot.slane %v619, 4
            %v622 = vadd.f32 %v619, %v621
            %v623 = vrot.slane %v622, 2
            %v624 = vadd.f32 %v622, %v623
            %v625 = vrot.slane %v624, 1
            %v626 = vadd.f32 %v624, %v625
            %v627 = vadd.f32 %v620, %v626
            %628 = vst [vmem:[#allocation2 + $0x8] sm:$0x1] %v627
            %v629 = vld [vmem:[#allocation2 + $0xa] sm:$0x1]
            %v630 = vmul.f32 %v619, %v619
            %v631 = vrot.slane %v630, 4
            %v632 = vadd.f32 %v630, %v631
            %v633 = vrot.slane %v632, 2
            %v634 = vadd.f32 %v632, %v633
            %v635 = vrot.slane %v634, 1
            %v636 = vadd.f32 %v634, %v635
            %v637 = vadd.f32 %v629, %v636
            %638 = vst [vmem:[#allocation2 + $0xa] sm:$0x1] %v637
            %v639 = vld [vmem:[#allocation3 + $0xd] sm:$0x1]
            %v640 = vlaneseq
            %v641 = vshrl.u32 %v640, 7
            %v642 = vsub.s32 0, %v641
            %v643 = vrot.slane %v639, %v642
            %v644 = vsub.f32 %v609, %v643
            %v645 = vld [vmem:[#allocation2 + $0x9] sm:$0x1]
            %v646 = vrot.slane %v644, 4
            %v647 = vadd.f32 %v644, %v646
            %v648 = vrot.slane %v647, 2
            %v649 = vadd.f32 %v647, %v648
            %v650 = vrot.slane %v649, 1
            %v651 = vadd.f32 %v649, %v650
            %v652 = vadd.f32 %v645, %v651
            %653 = vst [vmem:[#allocation2 + $0x9] sm:$0x1] %v652
            %v654 = vld [vmem:[#allocation2 + $0xb] sm:$0x1]
            %v655 = vmul.f32 %v644, %v644
            %v656 = vrot.slane %v655, 4
            %v657 = vadd.f32 %v655, %v656
            %v658 = vrot.slane %v657, 2
            %v659 = vadd.f32 %v657, %v658
            %v660 = vrot.slane %v659, 1
            %v661 = vadd.f32 %v659, %v660
            %v662 = vadd.f32 %v654, %v661
            %663 = vst [vmem:[#allocation2 + $0xb] sm:$0x1] %v662
            %p664 = scmp.eq.s32.totalorder %s23, 0
            // Predicated region
            $region61: #{tpu_custom_call.1} parent=59 // pred_check
              %p665 = pneg %p664
            $region62: #{tpu_custom_call.1} parent=59 // pred_check_branch
              %667 = sbr.rel (%p665) target = $region64
            $region63: #{tpu_custom_call.1} parent=59 // pred_region
              %s668 = sld [smem:[#allocation9 + $0x8]]
              %s669 = smax.f32 %s668, 0.0
              %s670 = smul.f32 %s668, %s669
              %s671 = sld [smem:[#allocation9 + $0xc]]
              %s672 = sld [smem:[#allocation9 + $0x10]]
              %v673 = vld [vmem:[#allocation2] sm:$0x1]
              %vm674 = vcmask 1040384
              %v675 = vsel %vm674, %v673, 0.0
              %676 = vadd.xlane.f32.xlu0 %v675
              %v677 = vpop.xlane.xlu0 %676
              %v678 = vstv %s192
              %v679 = vrcp.pop %v678
              %v680 = vmul.f32 %v677, %v679
              %v681 = vld [vmem:[#allocation2 + $0x4] sm:$0x1]
              %v682 = vsel %vm674, %v681, 0.0
              %683 = vadd.xlane.f32.xlu0 %v682
              %v684 = vpop.xlane.xlu0 %683
              %v685 = vmul.f32 %v684, %v679
              %v686 = vstv %s670
              %v687 = vadd.f32 %v686, %v680
              %v688 = vmul.f32 %v680, %v680
              %v689 = vsub.f32 %v685, %v688
              %v690 = vadd.f32 %v689, 1e-05
              %v691 = vrsqrt.pop %v690
              %v692 = vstv %s671
              %v693 = vmul.f32 %v692, %v691
              %v694 = vmul.f32 %v687, %v693
              %v695 = vstv %s672
              %v696 = vsub.f32 %v695, %v694
              %v697 = vmul.f32 %v686, %v693
              %v698 = vadd.f32 %v697, %v696
              %s699 = sld [smem:[#allocation9 + $0x9]]
              %s700 = smax.f32 %s699, 0.0
              %s701 = smul.f32 %s699, %s700
              %s702 = sld [smem:[#allocation9 + $0xd]]
              %s703 = sld [smem:[#allocation9 + $0x11]]
              %v704 = vld [vmem:[#allocation2 + $0x1] sm:$0x1]
              %v705 = vsel %vm674, %v704, 0.0
              %706 = vadd.xlane.f32.xlu0 %v705
              %v707 = vpop.xlane.xlu0 %706
              %v708 = vmul.f32 %v707, %v679
              %v709 = vld [vmem:[#allocation2 + $0x5] sm:$0x1]
              %v710 = vsel %vm674, %v709, 0.0
              %711 = vadd.xlane.f32.xlu0 %v710
              %v712 = vpop.xlane.xlu0 %711
              %v713 = vmul.f32 %v712, %v679
              %v714 = vstv %s701
              %v715 = vadd.f32 %v714, %v708
              %v716 = vmul.f32 %v708, %v708
              %v717 = vsub.f32 %v713, %v716
              %v718 = vadd.f32 %v717, 1e-05
              %v719 = vrsqrt.pop %v718
              %v720 = vstv %s702
              %v721 = vmul.f32 %v720, %v719
              %v722 = vmul.f32 %v715, %v721
              %v723 = vstv %s703
              %v724 = vsub.f32 %v723, %v722
              %v725 = vmul.f32 %v714, %v721
              %v726 = vadd.f32 %v725, %v724
              %s727 = sld [smem:[#allocation9 + $0xa]]
              %s728 = smax.f32 %s727, 0.0
              %s729 = smul.f32 %s727, %s728
              %s730 = sld [smem:[#allocation9 + $0xe]]
              %s731 = sld [smem:[#allocation9 + $0x12]]
              %v732 = vld [vmem:[#allocation2 + $0x2] sm:$0x1]
              %v733 = vsel %vm674, %v732, 0.0
              %734 = vadd.xlane.f32.xlu0 %v733
              %v735 = vpop.xlane.xlu0 %734
              %v736 = vmul.f32 %v735, %v679
              %v737 = vld [vmem:[#allocation2 + $0x6] sm:$0x1]
              %v738 = vsel %vm674, %v737, 0.0
              %739 = vadd.xlane.f32.xlu0 %v738
              %v740 = vpop.xlane.xlu0 %739
              %v741 = vmul.f32 %v740, %v679
              %v742 = vstv %s729
              %v743 = vadd.f32 %v742, %v736
              %v744 = vmul.f32 %v736, %v736
              %v745 = vsub.f32 %v741, %v744
              %v746 = vadd.f32 %v745, 1e-05
              %v747 = vrsqrt.pop %v746
              %v748 = vstv %s730
              %v749 = vmul.f32 %v748, %v747
              %v750 = vmul.f32 %v743, %v749
              %v751 = vstv %s731
              %v752 = vsub.f32 %v751, %v750
              %v753 = vmul.f32 %v742, %v749
              %v754 = vadd.f32 %v753, %v752
              %s755 = sld [smem:[#allocation9 + $0xb]]
              %s756 = smax.f32 %s755, 0.0
              %s757 = smul.f32 %s755, %s756
              %s758 = sld [smem:[#allocation9 + $0xf]]
              %s759 = sld [smem:[#allocation9 + $0x13]]
              %v760 = vld [vmem:[#allocation2 + $0x3] sm:$0x1]
              %v761 = vsel %vm674, %v760, 0.0
              %762 = vadd.xlane.f32.xlu0 %v761
              %v763 = vpop.xlane.xlu0 %762
              %v764 = vmul.f32 %v763, %v679
              %v765 = vld [vmem:[#allocation2 + $0x7] sm:$0x1]
              %v766 = vsel %vm674, %v765, 0.0
              %767 = vadd.xlane.f32.xlu0 %v766
              %v768 = vpop.xlane.xlu0 %767
              %v769 = vmul.f32 %v768, %v679
              %v770 = vstv %s757
              %v771 = vadd.f32 %v770, %v764
              %v772 = vmul.f32 %v764, %v764
              %v773 = vsub.f32 %v769, %v772
              %v774 = vadd.f32 %v773, 1e-05
              %v775 = vrsqrt.pop %v774
              %v776 = vstv %s758
              %v777 = vmul.f32 %v776, %v775
              %v778 = vmul.f32 %v771, %v777
              %v779 = vstv %s759
              %v780 = vsub.f32 %v779, %v778
              %v781 = vmul.f32 %v770, %v777
              %v782 = vadd.f32 %v781, %v780
              %s783 = sld [smem:[#allocation9 + $0x14]]
              %v784 = vstv %s783
              %v785 = vmul.f32 %v784, %v698
              %s786 = sld [smem:[#allocation9 + $0x15]]
              %v787 = vstv %s786
              %v788 = vmul.f32 %v787, %v726
              %v789 = vadd.f32 %v785, %v788
              %s790 = sld [smem:[#allocation9 + $0x16]]
              %v791 = vstv %s790
              %v792 = vmul.f32 %v791, %v754
              %v793 = vadd.f32 %v789, %v792
              %s794 = sld [smem:[#allocation9 + $0x17]]
              %v795 = vstv %s794
              %v796 = vmul.f32 %v795, %v782
              %v797 = vadd.f32 %v793, %v796
              %s798 = sld [smem:[#allocation9 + $0x1c]]
              %v799 = vstv %s798
              %v800 = vadd.f32 %v797, %v799
              %v801 = vmax.f32 %v800, 0.0
              %v802 = vmul.f32 %v800, %v801
              %s803 = sld [smem:[#allocation9 + $0x18]]
              %v804 = vstv %s803
              %v805 = vmul.f32 %v804, %v698
              %s806 = sld [smem:[#allocation9 + $0x19]]
              %v807 = vstv %s806
              %v808 = vmul.f32 %v807, %v726
              %v809 = vadd.f32 %v805, %v808
              %s810 = sld [smem:[#allocation9 + $0x1a]]
              %v811 = vstv %s810
              %v812 = vmul.f32 %v811, %v754
              %v813 = vadd.f32 %v809, %v812
              %s814 = sld [smem:[#allocation9 + $0x1b]]
              %v815 = vstv %s814
              %v816 = vmul.f32 %v815, %v782
              %v817 = vadd.f32 %v813, %v816
              %s818 = sld [smem:[#allocation9 + $0x1d]]
              %v819 = vstv %s818
              %v820 = vadd.f32 %v817, %v819
              %v821 = vmax.f32 %v820, 0.0
              %v822 = vmul.f32 %v820, %v821
              %s823 = sld [smem:[#allocation9 + $0x1e]]
              %s824 = sld [smem:[#allocation9 + $0x20]]
              %v825 = vld [vmem:[#allocation2 + $0x8] sm:$0x1]
              %v826 = vsel %vm674, %v825, 0.0
              %827 = vadd.xlane.f32.xlu0 %v826
              %v828 = vpop.xlane.xlu0 %827
              %v829 = vmul.f32 %v828, %v679
              %v830 = vld [vmem:[#allocation2 + $0xa] sm:$0x1]
              %v831 = vsel %vm674, %v830, 0.0
              %832 = vadd.xlane.f32.xlu0 %v831
              %v833 = vpop.xlane.xlu0 %832
              %v834 = vmul.f32 %v833, %v679
              %v835 = vadd.f32 %v802, %v829
              %v836 = vmul.f32 %v829, %v829
              %v837 = vsub.f32 %v834, %v836
              %v838 = vadd.f32 %v837, 1e-05
              %v839 = vrsqrt.pop %v838
              %v840 = vstv %s823
              %v841 = vmul.f32 %v840, %v839
              %v842 = vmul.f32 %v835, %v841
              %v843 = vstv %s824
              %v844 = vsub.f32 %v843, %v842
              %845 = vst [vmem:[#allocation3 + $0x8] sm:$0x1] %v841
              %846 = vst [vmem:[#allocation3 + $0xa] sm:$0x1] %v844
              %s847 = sld [smem:[#allocation9 + $0x1f]]
              %s848 = sld [smem:[#allocation9 + $0x21]]
              %v849 = vld [vmem:[#allocation2 + $0x9] sm:$0x1]
              %v850 = vsel %vm674, %v849, 0.0
              %851 = vadd.xlane.f32.xlu0 %v850
              %v852 = vpop.xlane.xlu0 %851
              %v853 = vmul.f32 %v852, %v679
              %v854 = vld [vmem:[#allocation2 + $0xb] sm:$0x1]
              %v855 = vsel %vm674, %v854, 0.0
              %856 = vadd.xlane.f32.xlu0 %v855
              %v857 = vpop.xlane.xlu0 %856
              %v858 = vmul.f32 %v857, %v679
              %v859 = vadd.f32 %v822, %v853
              %v860 = vmul.f32 %v853, %v853
              %v861 = vsub.f32 %v858, %v860
              %v862 = vadd.f32 %v861, 1e-05
              %v863 = vrsqrt.pop %v862
              %v864 = vstv %s847
              %v865 = vmul.f32 %v864, %v863
              %v866 = vmul.f32 %v859, %v865
              %v867 = vstv %s848
              %v868 = vsub.f32 %v867, %v866
              %869 = vst [vmem:[#allocation3 + $0x9] sm:$0x1] %v865
              %870 = vst [vmem:[#allocation3 + $0xb] sm:$0x1] %v868
            $region64: #{tpu_custom_call.1} parent=59 // pred_fallthru
              _
          $region60: #{tpu_custom_call.1} parent=55 // pred_fallthru
            _
          %p871 = scmp.eq.s32.totalorder %s22, 2
          // Predicated region
          $region65: #{tpu_custom_call.1} parent=55 // pred_check
            %p872 = pneg %p871
          $region66: #{tpu_custom_call.1} parent=55 // pred_check_branch
            %874 = sbr.rel (%p872) target = $region68
          $region67: #{tpu_custom_call.1} parent=55 // pred_region
            %v875 = vld [vmem:[#allocation3 + $0x8] sm:$0x1]
            %v876 = vlaneseq
            %v877 = vshrl.u32 %v876, 7
            %v878 = vsub.s32 0, %v877
            %v879 = vrot.slane %v875, %v878
            %v880 = vmul.f32 %v589, %v879
            %v881 = vld [vmem:[#allocation3 + $0xa] sm:$0x1]
            %v882 = vlaneseq
            %v883 = vshrl.u32 %v882, 7
            %v884 = vsub.s32 0, %v883
            %v885 = vrot.slane %v881, %v884
            %v886 = vadd.f32 %v880, %v885
            %v887 = vld [vmem:[#allocation3 + $0x9] sm:$0x1]
            %v888 = vlaneseq
            %v889 = vshrl.u32 %v888, 7
            %v890 = vsub.s32 0, %v889
            %v891 = vrot.slane %v887, %v890
            %v892 = vmul.f32 %v609, %v891
            %v893 = vld [vmem:[#allocation3 + $0xb] sm:$0x1]
            %v894 = vlaneseq
            %v895 = vshrl.u32 %v894, 7
            %v896 = vsub.s32 0, %v895
            %v897 = vrot.slane %v893, %v896
            %v898 = vadd.f32 %v892, %v897
            %s899 = sld [smem:[#allocation9 + $0x22]]
            %v900 = vstv %s899
            %v901 = vmul.f32 %v900, %v886
            %s902 = sld [smem:[#allocation9 + $0x23]]
            %v903 = vstv %s902
            %v904 = vmul.f32 %v903, %v898
            %v905 = vadd.f32 %v901, %v904
            %s906 = sld [smem:[#allocation9 + $0x24]]
            %v907 = vstv %s906
            %v908 = vadd.f32 %v905, %v907
            %v909 = vmax.f32 %v908, 0.0
            %910 = vst [vmem:[#allocation10] sm:$0xff] %v909
          $region68: #{tpu_custom_call.1} parent=55 // pred_fallthru
            _
        $region56: #{tpu_custom_call.1} parent=31 // pred_fallthru
          _
        // Predicated region
        $region69: #{tpu_custom_call.1} parent=31 // pred_check
          %p911 = pneg %p116
        $region70: #{tpu_custom_call.1} parent=31 // pred_check_branch
          %913 = sbr.rel (%p911) target = $region72
        $region71: #{tpu_custom_call.1} parent=31 // pred_region
          %s915 = ssub.s32 128, 128
          %916 = vsyncadd [#allocation7], %s915
          %s917 = smul.addr %s23, 128
          %s918 = scalar_lea.hbm %s3, %s917
          %s920 = sshll.u32 [#allocation10], 4
          %s921 = int_to_ptr.vmem [resolvable:$true] %s920
          %923 = dma.vmem_to_hbm [thread:$0]  %s921, 128, %s918, [#allocation7]
        $region72: #{tpu_custom_call.1} parent=31 // pred_fallthru
          _
        // Predicated region
        $region73: #{tpu_custom_call.1} parent=31 // pred_check
          %p924 = pneg %p116
        $region74: #{tpu_custom_call.1} parent=31 // pred_check_branch
          %926 = sbr.rel (%p924) target = $region76
        $region75: #{tpu_custom_call.1} parent=31 // pred_region
          %927 = dma.done [#allocation7], 128
        $region76: #{tpu_custom_call.1} parent=31 // pred_fallthru
          _
      $region32: #{tpu_custom_call.1} parent=5 // pred_fallthru
        _
      %p928 = scmp.le.s32.totalorder 2, %s13
      // Predicated region
      $region77: #{tpu_custom_call.1} parent=5 // pred_check
        %p929 = pneg %p928
      $region78: #{tpu_custom_call.1} parent=5 // pred_check_branch
        %931 = sbr.rel (%p929) target = $region80
      $region79: #{tpu_custom_call.1} parent=5 // pred_region
        %s932 = ssub.s32 %s13, 2
      $region80: #{tpu_custom_call.1} parent=5 // pred_fallthru
        _
    $region6: #{tpu_custom_call.1} parent=1 // loop_footer
      %s17 = sadd.s32 1, %s13
    $region7: #{tpu_custom_call.1} parent=1 // loop_footer_branch
      %12 = sbr.rel target = $region3
    $region8: #{tpu_custom_call.1} parent=1 // loop_exit
      _
    %933 = vsyncpa [#allocation6], 1
    %s934 = scalar_lea.sflag [#allocation6], 1
    %935 = vsyncpa %s934, 1
    %936 = vsyncpa [#allocation7], 1
    %s937 = scalar_lea.sflag [#allocation7], 1
    %938 = vsyncpa %s937, 1
    %939 = vsyncpa [#allocation8], 1
    %s940 = scalar_lea.sflag [#allocation8], 1
    %941 = vsyncpa %s940, 1

</llo_original>
